<compile_context>
chip_gen: v5e
topology: v5e:2x2
jax: 0.10.0
libtpu: 0.0.40
codegen_flags: <defaults>
</compile_context>

<pallas_src>
import functools
import math

import jax
import jax.numpy as jnp
from jax import lax
from jax.experimental import pallas as pl
from jax.experimental.pallas import tpu as pltpu


def _pick_row_tile(rows):
    for tm in (512, 256, 128, 64, 32, 16, 8):
        if rows % tm == 0:
            return tm
    return rows


# ---------------------------------------------------------------------------
# Phase 1: FFTGate activation + LSTM input projection, all timesteps at once.
# ---------------------------------------------------------------------------
def _input_proj_kernel(params_ref,   # SMEM (2,)  f32: [clamp(gamma1), phi]
                       x_ref,        # (TM, E)    f32  embedding rows (r = t*B + b)
                       fmf_ref,      # (TM, 1)    f32  freq_factor * freq_magnitude
                       wih_ref,      # (E, 4H)    bf16
                       b_ref,        # (1, 4H)    f32  b_ih + b_hh
                       out_ref):     # (TM, 4H)   f32
    gamma1 = params_ref[0]
    phi = params_ref[1]
    x = x_ref[...]
    # FFTGate: gate = sigmoid(gamma1*x - freq_factor*freq_magnitude)
    gate = jax.nn.sigmoid(gamma1 * x - fmf_ref[...])
    act = x * gate + 0.05 * jnp.sin(phi * x)
    # TODO(synk): nn.Dropout is identity in eval mode; training-mode RNG masking omitted.
    out_ref[...] = (
        jnp.dot(act.astype(jnp.bfloat16), wih_ref[...],
                preferred_element_type=jnp.float32)
        + b_ref[...])


# ---------------------------------------------------------------------------
# Phase 2: serial LSTM recurrence over blocks of TT timesteps.
# ---------------------------------------------------------------------------
def _lstm_recurrence_kernel(xproj_ref,  # (TT, B, 4H) f32
                            whh_ref,    # (H, 4H)     bf16
                            h_ref,      # (B, H)      f32  (output / resident state)
                            c_ref,      # (B, H)      f32  (output / resident state)
                            *, tt, hidden):
    tb = pl.program_id(0)

    @pl.when(tb == 0)
    def _():
        h_ref[...] = jnp.zeros_like(h_ref)
        c_ref[...] = jnp.zeros_like(c_ref)

    whh = whh_ref[...]   # load the bf16 weight tile once per time-block

    def step(s, carry):
        h, c = carry
        gates = xproj_ref[s] + jnp.dot(h.astype(jnp.bfloat16), whh,
                                       preferred_element_type=jnp.float32)
        i_g = jax.nn.sigmoid(gates[:, 0 * hidden:1 * hidden])
        f_g = jax.nn.sigmoid(gates[:, 1 * hidden:2 * hidden])
        g_g = jnp.tanh(gates[:, 2 * hidden:3 * hidden])
        o_g = jax.nn.sigmoid(gates[:, 3 * hidden:4 * hidden])
        c = f_g * c + i_g * g_g
        h = o_g * jnp.tanh(c)
        return h, c

    h, c = lax.fori_loop(0, tt, step, (h_ref[...], c_ref[...]), unroll=True)
    # Write the resident state back every grid step (safer than last-step-only).
    h_ref[...] = h
    c_ref[...] = c


# ---------------------------------------------------------------------------
# FFTGate spectral-history glue (first forward of a fresh module): 11 zero rows
# plus the current per-batch mean; FFT magnitude, clamp, smoothing.
# ---------------------------------------------------------------------------
def _fftgate_freq_magnitude(emb, *, history_len, epoch):
    T, B, E = emb.shape
    m = jnp.mean(emb, axis=(0, 2))                                    # (B,)
    history = jnp.concatenate(
        [jnp.zeros((history_len - 1, B), jnp.float32), m[None, :]], axis=0)
    freq_mag = jnp.abs(jnp.fft.fft(history, axis=0)).mean(axis=0)     # (B,)
    freq_mag = jnp.clip(freq_mag, 0.05, 1.5)
    smoothing = max(0.1, 1.0 / (epoch + 10))
    freq_mag = (1.0 - smoothing) * freq_mag + smoothing * freq_mag.mean()
    return freq_mag.astype(jnp.float32)


def encoder_forward(x_ids, emb_w, w_ihT, w_hhT, bias, *,
                    gamma1=1.5, phi=0.1, history_len=12, epoch=0):
    T, B = x_ids.shape
    V, E = emb_w.shape
    H = w_ihT.shape[1] // 4

    # --- glue: embedding gather + FFTGate spectral branch (tiny, stays in XLA) ---
    # TODO(synk): gather could move in-kernel (scalar-prefetched ids + pl.Element
    # row index_map) to avoid the (T,B,E) HBM round trip on large shapes.
    emb = emb_w[x_ids].astype(jnp.float32)                            # (T, B, E)
    freq_mag = _fftgate_freq_magnitude(emb, history_len=history_len, epoch=epoch)

    gamma1_c = float(min(max(gamma1, 0.1), 6.0))
    freq_factor = float(min(0.3 + 0.007 * epoch, 0.8))
    params = jnp.array([gamma1_c, phi], jnp.float32)

    # Precompute freq_factor * freq_magnitude per flattened row (folds the
    # per-step broadcast/multiply out of the kernels).
    fmf_rows = jnp.tile(freq_factor * freq_mag, (T,)).reshape(T * B, 1)

    # bf16 matmul operands (native MXU dtype); state & accumulation stay f32.
    wih_bf16 = w_ihT.astype(jnp.bfloat16)
    whh_bf16 = w_hhT.astype(jnp.bfloat16)
    bias_f32 = bias.astype(jnp.float32).reshape(1, 4 * H)

    # ---- Phase 1: batched FFTGate + input projection -------------------------
    rows = T * B
    tm = _pick_row_tile(rows)
    x_rows = emb.reshape(rows, E)

    xproj_rows = pl.pallas_call(
        _input_proj_kernel,
        out_shape=jax.ShapeDtypeStruct((rows, 4 * H), jnp.float32),
        grid_spec=pltpu.PrefetchScalarGridSpec(
            num_scalar_prefetch=0,
            grid=(rows // tm,),
            in_specs=[
                pl.BlockSpec(memory_space=pltpu.MemorySpace.SMEM),    # scalars
                pl.BlockSpec((tm, E), lambda r: (r, 0)),              # embedding rows
                pl.BlockSpec((tm, 1), lambda r: (r, 0)),              # freq term
                pl.BlockSpec((E, 4 * H), lambda r: (0, 0)),           # W_ih^T (bf16)
                pl.BlockSpec((1, 4 * H), lambda r: (0, 0)),           # bias
            ],
            out_specs=pl.BlockSpec((tm, 4 * H), lambda r: (r, 0)),
        ),
        compiler_params=pltpu.CompilerParams(
            dimension_semantics=("parallel",),          # usable by v7x's 2nd TC
            vmem_limit_bytes=32 * 1024 * 1024),
    )(params, x_rows, fmf_rows, wih_bf16, bias_f32)
    xproj = xproj_rows.reshape(T, B, 4 * H)

    # ---- Phase 2: serial recurrence over blocks of TT timesteps --------------
    tt = math.gcd(T, 8)   # time-block size (divides T, <= 8)
    rec_kernel = functools.partial(_lstm_recurrence_kernel, tt=tt, hidden=H)
    h_out, c_out = pl.pallas_call(
        rec_kernel,
        out_shape=(jax.ShapeDtypeStruct((B, H), jnp.float32),
                   jax.ShapeDtypeStruct((B, H), jnp.float32)),
        grid_spec=pltpu.PrefetchScalarGridSpec(
            num_scalar_prefetch=0,
            grid=(T // tt,),
            in_specs=[
                pl.BlockSpec((tt, B, 4 * H), lambda t: (t, 0, 0)),    # xproj block
                # Constant-index weight block: never re-fetched across grid steps.
                # TODO(synk): for production H on v7x (64 MiB VMEM), single-buffer
                # this block (pipeline_mode=pl.Buffered(1)) or tile along 4H.
                pl.BlockSpec((H, 4 * H), lambda t: (0, 0)),           # W_hh^T (bf16)
            ],
            out_specs=[
                pl.BlockSpec((B, H), lambda t: (0, 0)),
                pl.BlockSpec((B, H), lambda t: (0, 0)),
            ],
        ),
        compiler_params=pltpu.CompilerParams(
            dimension_semantics=("arbitrary",),
            vmem_limit_bytes=32 * 1024 * 1024),
    )(xproj, whh_bf16)

    hidden = h_out[None, :, :]   # (num_layers=1, B, H)
    cell = c_out[None, :, :]
    return hidden, cell


# ---------------------------------------------------------------------------
# Pure-JAX f32 reference for a correctness check of the kernel math.
# ---------------------------------------------------------------------------
def _reference_forward(x_ids, emb_w, w_ihT, w_hhT, bias, *,
                       gamma1=1.5, phi=0.1, history_len=12, epoch=0):
    T, B = x_ids.shape
    H = w_ihT.shape[1] // 4
    emb = emb_w[x_ids].astype(jnp.float32)
    freq_mag = _fftgate_freq_magnitude(emb, history_len=history_len, epoch=epoch)
    gamma1_c = min(max(gamma1, 0.1), 6.0)
    freq_factor = min(0.3 + 0.007 * epoch, 0.8)
    gate = jax.nn.sigmoid(gamma1_c * emb - freq_factor * freq_mag[None, :, None])
    act = emb * gate + 0.05 * jnp.sin(phi * emb)
    h = jnp.zeros((B, H), jnp.float32)
    c = jnp.zeros((B, H), jnp.float32)
    for t in range(T):
        g = act[t] @ w_ihT + h @ w_hhT + bias.reshape(1, 4 * H)
        i_g = jax.nn.sigmoid(g[:, 0 * H:1 * H])
        f_g = jax.nn.sigmoid(g[:, 1 * H:2 * H])
        g_g = jnp.tanh(g[:, 2 * H:3 * H])
        o_g = jax.nn.sigmoid(g[:, 3 * H:4 * H])
        c = f_g * c + i_g * g_g
        h = o_g * jnp.tanh(c)
    return h[None], c[None]


if __name__ == "__main__":
    key = jax.random.PRNGKey(0)
    T, B = 8, 8            # seq_len, batch (B >= 8 fills the f32 sublanes)
    V, E, H = 50, 32, 128  # vocab, embedding_size, hidden_size (lane-aligned gates)

    k1, k2, k3, k4, k5, k6 = jax.random.split(key, 6)
    x_ids = jax.random.randint(k1, (T, B), 0, V, dtype=jnp.int32)
    emb_w = jax.random.normal(k2, (V, E), jnp.float32)            # nn.Embedding ~ N(0,1)
    bound = 1.0 / math.sqrt(H)
    w_ihT = jax.random.uniform(k3, (E, 4 * H), jnp.float32, -bound, bound)
    w_hhT = jax.random.uniform(k4, (H, 4 * H), jnp.float32, -bound, bound)
    b_ih = jax.random.uniform(k5, (4 * H,), jnp.float32, -bound, bound)
    b_hh = jax.random.uniform(k6, (4 * H,), jnp.float32, -bound, bound)
    bias = (b_ih + b_hh).reshape(1, 4 * H)

    hidden, cell = encoder_forward(x_ids, emb_w, w_ihT, w_hhT, bias, epoch=0)
    jax.block_until_ready((hidden, cell))

    assert hidden.shape == (1, B, H) and cell.shape == (1, B, H)
    assert bool(jnp.all(jnp.isfinite(hidden))) and bool(jnp.all(jnp.isfinite(cell)))

    # Loose tolerance: kernel matmul operands are bf16, the reference is pure f32.
    ref_h, ref_c = _reference_forward(x_ids, emb_w, w_ihT, w_hhT, bias, epoch=0)
    err = max(float(jnp.max(jnp.abs(hidden - ref_h))),
              float(jnp.max(jnp.abs(cell - ref_c))))
    assert err < 0.1, f"kernel vs reference max abs err {err}"

    print("KERNEL_OK")
</pallas_src>

<mosaic_0001>
module attributes {stable_mosaic.version = 11 : i64} {
  func.func @_input_proj_kernel(%arg0: i32, %arg1: memref<2xf32, #tpu.memory_space<smem>>, %arg2: memref<64x32xf32, #tpu.memory_space<vmem>>, %arg3: memref<64x1xf32, #tpu.memory_space<vmem>>, %arg4: memref<32x512xbf16, #tpu.memory_space<vmem>>, %arg5: memref<1x512xf32, #tpu.memory_space<vmem>>, %arg6: memref<64x512xf32, #tpu.memory_space<vmem>>) attributes {dimension_semantics = [#tpu.dimension_semantics<parallel>], iteration_bounds = array<i64: 1>, scalar_prefetch = 0 : i64, scratch_operands = 0 : i64, tpu.core_type = #tpu.core_type<tc>, window_params = [{transform_indices = @transform_0, window_bounds = array<i64: 2>}, {transform_indices = @transform_1, window_bounds = array<i64: 64, 32>}, {transform_indices = @transform_2, window_bounds = array<i64: 64, 1>}, {pipeline_mode = #tpu.pipeline_mode<synchronous>, transform_indices = @transform_3, window_bounds = array<i64: 32, 512>}, {pipeline_mode = #tpu.pipeline_mode<synchronous>, transform_indices = @transform_4, window_bounds = array<i64: 1, 512>}, {transform_indices = @transform_5, window_bounds = array<i64: 64, 512>}]} {
    %c0 = arith.constant 0 : index
    %0 = memref.load %arg1[%c0] : memref<2xf32, #tpu.memory_space<smem>>
    %c1 = arith.constant 1 : index
    %1 = memref.load %arg1[%c1] : memref<2xf32, #tpu.memory_space<smem>>
    %c0_0 = arith.constant 0 : index
    %c0_1 = arith.constant 0 : index
    %2 = vector.load %arg2[%c0_0, %c0_1] : memref<64x32xf32, #tpu.memory_space<vmem>>, vector<64x32xf32>
    %3 = vector.broadcast %0 : f32 to vector<64x32xf32>
    %4 = arith.mulf %3, %2 : vector<64x32xf32>
    %c0_2 = arith.constant 0 : index
    %c0_3 = arith.constant 0 : index
    %5 = vector.load %arg3[%c0_2, %c0_3] : memref<64x1xf32, #tpu.memory_space<vmem>>, vector<64x1xf32>
    %6 = vector.broadcast %5 : vector<64x1xf32> to vector<64x32xf32>
    %7 = arith.subf %4, %6 : vector<64x32xf32>
    %8 = arith.negf %7 : vector<64x32xf32>
    %9 = math.exp %8 : vector<64x32xf32>
    %cst = arith.constant 1.000000e+00 : f32
    %10 = vector.broadcast %cst : f32 to vector<64x32xf32>
    %11 = arith.addf %10, %9 : vector<64x32xf32>
    %12 = arith.divf %10, %11 : vector<64x32xf32>
    %13 = arith.mulf %2, %12 : vector<64x32xf32>
    %14 = vector.broadcast %1 : f32 to vector<64x32xf32>
    %15 = arith.mulf %14, %2 : vector<64x32xf32>
    %16 = math.sin %15 : vector<64x32xf32>
    %cst_4 = arith.constant 5.000000e-02 : f32
    %17 = vector.broadcast %cst_4 : f32 to vector<64x32xf32>
    %18 = arith.mulf %17, %16 : vector<64x32xf32>
    %19 = arith.addf %13, %18 : vector<64x32xf32>
    %20 = arith.truncf %19 : vector<64x32xf32> to vector<64x32xbf16>
    %c0_5 = arith.constant 0 : index
    %c0_6 = arith.constant 0 : index
    %21 = vector.load %arg4[%c0_5, %c0_6] : memref<32x512xbf16, #tpu.memory_space<vmem>>, vector<32x512xbf16>
    %cst_7 = arith.constant dense<0.000000e+00> : vector<64x512xf32>
    %22 = tpu.matmul %20, %21, %cst_7 {dimension_numbers = #tpu.dot_dimension_numbers<[1], [0], [0], [1], [0, 0, 1, 1], [], []>} : vector<64x32xbf16>, vector<32x512xbf16>, vector<64x512xf32> -> vector<64x512xf32>
    %c0_8 = arith.constant 0 : index
    %c0_9 = arith.constant 0 : index
    %23 = vector.load %arg5[%c0_8, %c0_9] : memref<1x512xf32, #tpu.memory_space<vmem>>, vector<1x512xf32>
    %24 = vector.broadcast %23 : vector<1x512xf32> to vector<64x512xf32>
    %25 = arith.addf %22, %24 : vector<64x512xf32>
    %c0_10 = arith.constant 0 : index
    %c0_11 = arith.constant 0 : index
    %26 = vector.load %arg6[%c0_10, %c0_11] : memref<64x512xf32, #tpu.memory_space<vmem>>, vector<64x512xf32>
    tpu.vector_store %arg6[%c0_10, %c0_11], %25 {strides = array<i32>} : memref<64x512xf32, #tpu.memory_space<vmem>>, vector<64x512xf32>,
    return
  }
  func.func @transform_0(%arg0: i32) -> i32 {
    %c0_i32 = arith.constant 0 : i32
    %c0_i32_0 = arith.constant 0 : i32
    return %c0_i32 : i32
  }
  func.func @transform_1(%arg0: i32) -> (i32, i32) {
    %c0_i32 = arith.constant 0 : i32
    %c0_i32_0 = arith.constant 0 : i32
    return %arg0, %c0_i32 : i32, i32
  }
  func.func @transform_2(%arg0: i32) -> (i32, i32) {
    %c0_i32 = arith.constant 0 : i32
    %c0_i32_0 = arith.constant 0 : i32
    return %arg0, %c0_i32 : i32, i32
  }
  func.func @transform_3(%arg0: i32) -> (i32, i32) {
    %c0_i32 = arith.constant 0 : i32
    %c0_i32_0 = arith.constant 0 : i32
    %c0_i32_1 = arith.constant 0 : i32
    return %c0_i32, %c0_i32_0 : i32, i32
  }
  func.func @transform_4(%arg0: i32) -> (i32, i32) {
    %c0_i32 = arith.constant 0 : i32
    %c0_i32_0 = arith.constant 0 : i32
    %c0_i32_1 = arith.constant 0 : i32
    return %c0_i32, %c0_i32_0 : i32, i32
  }
  func.func @transform_5(%arg0: i32) -> (i32, i32) {
    %c0_i32 = arith.constant 0 : i32
    %c0_i32_0 = arith.constant 0 : i32
    return %arg0, %c0_i32 : i32, i32
  }
}

</mosaic_0001>

<llo_original>
// kernel: tpu_custom_call.1
$region0: #{tpu_custom_call.1}
  #allocation0 [shape = 'u32[]', space=smem, size = 0x4, offset = 0x4, fixed_abs, tag = 'smem constant byte address 0x4 - core index']
  #allocation1 [shape = 'u32[72,128]{1,0:T(1,128)}', space=vmem, size = 0x9000, scoped, tag = 'internal scratch']
  %s0 = inlined_call_operand.vmem [shape: f32[2], index: 0, kind: input, shape index: {}]
  %s1 = inlined_call_operand.vmem [shape: f32[64,32], index: 1, kind: input, shape index: {}]
  %s2 = inlined_call_operand.vmem [shape: f32[64,1], index: 2, kind: input, shape index: {}]
  %s3 = inlined_call_operand.vmem [shape: bf16[32,512], index: 3, kind: input, shape index: {}]
  %s4 = inlined_call_operand.vmem [shape: f32[1,512], index: 4, kind: input, shape index: {}]
  %s5 = inlined_call_operand.hbm [shape: f32[64,512], index: 5, kind: output, shape index: {}]
  %s6 = sld [smem:[#allocation0]]
  $region34: #{tpu_custom_call.1} parent=0
    _
  %s8 = ssub.s32 1, %s6
  %s9 = scalar_select 0, %s8, %s6
  $region1: #{tpu_custom_call.1} parent=0
    #allocation2 [shape = 'u8[512]{0}', space=smem, size = 0x200, scoped, tag = 'input window, operand 0, single buffered']
    #allocation3 [shape = 's32[1]{0}', space=sflag, size = 0x4, scoped, tag = 'scoped memory for tpu_custom_call.1']
    #allocation4 [shape = 's32[1]{0}', space=sflag, size = 0x4, scoped, tag = 'scoped memory for tpu_custom_call.1']
    #allocation5 [shape = 'u8[131072]{0}', space=vmem, size = 0x20000, scoped, tag = 'output window, operand 0, single buffered']
    %10 = vsyncpa [#allocation4], 0
    %11 = vsyncpa [#allocation3], 0
    // Predicated region
    $region2: #{tpu_custom_call.1} parent=1 // pred_check
      _
    $region3: #{tpu_custom_call.1} parent=1 // pred_check_branch
      %13 = sbr.rel (0) target = $region5
    $region4: #{tpu_custom_call.1} parent=1 // pred_region
      %15 = vsyncadd [#allocation4], 0
      %s17 = sshll.u32 %s0, 4
      %s18 = int_to_ptr.vmem [resolvable:$true] %s17
      %20 = dma.vmem_to_smem %s18, 16, [#allocation2], [#allocation4]
    $region5: #{tpu_custom_call.1} parent=1 // pred_fallthru
      _
    // Predicated region
    $region6: #{tpu_custom_call.1} parent=1 // pred_check
      _
    $region7: #{tpu_custom_call.1} parent=1 // pred_check_branch
      %22 = sbr.rel (0) target = $region9
    $region8: #{tpu_custom_call.1} parent=1 // pred_region
      _
    $region9: #{tpu_custom_call.1} parent=1 // pred_fallthru
      _
    // Predicated region
    $region10: #{tpu_custom_call.1} parent=1 // pred_check
      _
    $region11: #{tpu_custom_call.1} parent=1 // pred_check_branch
      %24 = sbr.rel (0) target = $region13
    $region12: #{tpu_custom_call.1} parent=1 // pred_region
      _
    $region13: #{tpu_custom_call.1} parent=1 // pred_fallthru
      _
    // Predicated region
    $region14: #{tpu_custom_call.1} parent=1 // pred_check
      _
    $region15: #{tpu_custom_call.1} parent=1 // pred_check_branch
      %26 = sbr.rel (0) target = $region17
    $region16: #{tpu_custom_call.1} parent=1 // pred_region
      _
    $region17: #{tpu_custom_call.1} parent=1 // pred_fallthru
      _
    // Predicated region
    $region18: #{tpu_custom_call.1} parent=1 // pred_check
      _
    $region19: #{tpu_custom_call.1} parent=1 // pred_check_branch
      %28 = sbr.rel (0) target = $region21
    $region20: #{tpu_custom_call.1} parent=1 // pred_region
      _
    $region21: #{tpu_custom_call.1} parent=1 // pred_fallthru
      _
    // Predicated region
    $region22: #{tpu_custom_call.1} parent=1 // pred_check
      _
    $region23: #{tpu_custom_call.1} parent=1 // pred_check_branch
      %30 = sbr.rel (0) target = $region25
    $region24: #{tpu_custom_call.1} parent=1 // pred_region
      %32 = dma.done [#allocation4], 16
    $region25: #{tpu_custom_call.1} parent=1 // pred_fallthru
      _
    %33 = sfence
    %s35 = sld [smem:[#allocation2]]
    %s36 = sld [smem:[#allocation2 + $0x1]]
    %v37 = vld [vmem:[%s1] sm:$0xff]
    %v38 = vld [vmem:[%s1 + $0x8] sm:$0xff]
    %v39 = vld [vmem:[%s1 + $0x10] sm:$0xff]
    %v40 = vld [vmem:[%s1 + $0x18] sm:$0xff]
    %v41 = vld [vmem:[%s1 + $0x20] sm:$0xff]
    %v42 = vld [vmem:[%s1 + $0x28] sm:$0xff]
    %v43 = vld [vmem:[%s1 + $0x30] sm:$0xff]
    %v44 = vld [vmem:[%s1 + $0x38] sm:$0xff]
    %v45 = vstv %s35
    %v46 = vmul.f32 %v45, %v37
    %v47 = vmul.f32 %v45, %v38
    %v48 = vmul.f32 %v45, %v39
    %v49 = vmul.f32 %v45, %v40
    %v50 = vmul.f32 %v45, %v41
    %v51 = vmul.f32 %v45, %v42
    %v52 = vmul.f32 %v45, %v43
    %v53 = vmul.f32 %v45, %v44
    %v54 = vld [vmem:[%s2] sm:$0xff]
    %v55 = vld [vmem:[%s2 + $0x8] sm:$0xff]
    %v56 = vld [vmem:[%s2 + $0x10] sm:$0xff]
    %v57 = vld [vmem:[%s2 + $0x18] sm:$0xff]
    %v58 = vld [vmem:[%s2 + $0x20] sm:$0xff]
    %v59 = vld [vmem:[%s2 + $0x28] sm:$0xff]
    %v60 = vld [vmem:[%s2 + $0x30] sm:$0xff]
    %v61 = vld [vmem:[%s2 + $0x38] sm:$0xff]
    %63 = vset.pattern.permute.xlu0 0
    %64 = vperm.xlu0 %63, %v54
    %v65 = vpop.permute.xlu0 %64
    %68 = vset.pattern.permute.xlu0 0
    %69 = vperm.xlu0 %68, %v55
    %v70 = vpop.permute.xlu0 %69
    %73 = vset.pattern.permute.xlu0 0
    %74 = vperm.xlu0 %73, %v56
    %v75 = vpop.permute.xlu0 %74
    %78 = vset.pattern.permute.xlu0 0
    %79 = vperm.xlu0 %78, %v57
    %v80 = vpop.permute.xlu0 %79
    %83 = vset.pattern.permute.xlu0 0
    %84 = vperm.xlu0 %83, %v58
    %v85 = vpop.permute.xlu0 %84
    %88 = vset.pattern.permute.xlu0 0
    %89 = vperm.xlu0 %88, %v59
    %v90 = vpop.permute.xlu0 %89
    %93 = vset.pattern.permute.xlu0 0
    %94 = vperm.xlu0 %93, %v60
    %v95 = vpop.permute.xlu0 %94
    %98 = vset.pattern.permute.xlu0 0
    %99 = vperm.xlu0 %98, %v61
    %v100 = vpop.permute.xlu0 %99
    %v102 = vsub.f32 %v46, %v65
    %v103 = vsub.f32 %v47, %v70
    %v104 = vsub.f32 %v48, %v75
    %v105 = vsub.f32 %v49, %v80
    %v106 = vsub.f32 %v50, %v85
    %v107 = vsub.f32 %v51, %v90
    %v108 = vsub.f32 %v52, %v95
    %v109 = vsub.f32 %v53, %v100
    %v110 = vxor.u32 %v102, 2147483648
    %v111 = vxor.u32 %v103, 2147483648
    %v112 = vxor.u32 %v104, 2147483648
    %v113 = vxor.u32 %v105, 2147483648
    %v114 = vxor.u32 %v106, 2147483648
    %v115 = vxor.u32 %v107, 2147483648
    %v116 = vxor.u32 %v108, 2147483648
    %v117 = vxor.u32 %v109, 2147483648
    %v118 = vmul.f32 %v110, 1.442695
    %v119 = vpow.pop %v118
    %v120 = vmul.f32 %v111, 1.442695
    %v121 = vpow.pop %v120
    %v122 = vmul.f32 %v112, 1.442695
    %v123 = vpow.pop %v122
    %v124 = vmul.f32 %v113, 1.442695
    %v125 = vpow.pop %v124
    %v126 = vmul.f32 %v114, 1.442695
    %v127 = vpow.pop %v126
    %v128 = vmul.f32 %v115, 1.442695
    %v129 = vpow.pop %v128
    %v130 = vmul.f32 %v116, 1.442695
    %v131 = vpow.pop %v130
    %v132 = vmul.f32 %v117, 1.442695
    %v133 = vpow.pop %v132
    %v134 = vadd.f32 %v119, 1.0
    %v135 = vadd.f32 %v121, 1.0
    %v136 = vadd.f32 %v123, 1.0
    %v137 = vadd.f32 %v125, 1.0
    %v138 = vadd.f32 %v127, 1.0
    %v139 = vadd.f32 %v129, 1.0
    %v140 = vadd.f32 %v131, 1.0
    %v141 = vadd.f32 %v133, 1.0
    %v142 = vrcp.pop %v134
    %v143 = vmul.f32 %v134, %v142
    %v144 = vsub.f32 1.0, %v143
    %v145 = vmul.f32 %v142, %v144
    %v146 = vadd.f32 %v142, %v145
    %vm147 = vweird.f32 %v134
    %vm148 = vweird.f32 %v142
    %vm149 = vmor %vm147, %vm148
    %v150 = vsel %vm149, %v142, %v146
    %v151 = vand.u32 2147483647, %v134
    %vm152 = vcmp.eq.f32.partialorder %v151, 8.507059e+37
    %v153 = vand.u32 %v134, 2147483648
    %v154 = vor.u32 1.1754944e-38, %v153
    %v155 = vsel %vm152, %v154, %v150
    %v156 = vmul.f32 1.0, %v155
    %v157 = vrcp.pop %v135
    %v158 = vmul.f32 %v135, %v157
    %v159 = vsub.f32 1.0, %v158
    %v160 = vmul.f32 %v157, %v159
    %v161 = vadd.f32 %v157, %v160
    %vm162 = vweird.f32 %v135
    %vm163 = vweird.f32 %v157
    %vm164 = vmor %vm162, %vm163
    %v165 = vsel %vm164, %v157, %v161
    %v166 = vand.u32 2147483647, %v135
    %vm167 = vcmp.eq.f32.partialorder %v166, 8.507059e+37
    %v168 = vand.u32 %v135, 2147483648
    %v169 = vor.u32 1.1754944e-38, %v168
    %v170 = vsel %vm167, %v169, %v165
    %v171 = vmul.f32 1.0, %v170
    %v172 = vrcp.pop %v136
    %v173 = vmul.f32 %v136, %v172
    %v174 = vsub.f32 1.0, %v173
    %v175 = vmul.f32 %v172, %v174
    %v176 = vadd.f32 %v172, %v175
    %vm177 = vweird.f32 %v136
    %vm178 = vweird.f32 %v172
    %vm179 = vmor %vm177, %vm178
    %v180 = vsel %vm179, %v172, %v176
    %v181 = vand.u32 2147483647, %v136
    %vm182 = vcmp.eq.f32.partialorder %v181, 8.507059e+37
    %v183 = vand.u32 %v136, 2147483648
    %v184 = vor.u32 1.1754944e-38, %v183
    %v185 = vsel %vm182, %v184, %v180
    %v186 = vmul.f32 1.0, %v185
    %v187 = vrcp.pop %v137
    %v188 = vmul.f32 %v137, %v187
    %v189 = vsub.f32 1.0, %v188
    %v190 = vmul.f32 %v187, %v189
    %v191 = vadd.f32 %v187, %v190
    %vm192 = vweird.f32 %v137
    %vm193 = vweird.f32 %v187
    %vm194 = vmor %vm192, %vm193
    %v195 = vsel %vm194, %v187, %v191
    %v196 = vand.u32 2147483647, %v137
    %vm197 = vcmp.eq.f32.partialorder %v196, 8.507059e+37
    %v198 = vand.u32 %v137, 2147483648
    %v199 = vor.u32 1.1754944e-38, %v198
    %v200 = vsel %vm197, %v199, %v195
    %v201 = vmul.f32 1.0, %v200
    %v202 = vrcp.pop %v138
    %v203 = vmul.f32 %v138, %v202
    %v204 = vsub.f32 1.0, %v203
    %v205 = vmul.f32 %v202, %v204
    %v206 = vadd.f32 %v202, %v205
    %vm207 = vweird.f32 %v138
    %vm208 = vweird.f32 %v202
    %vm209 = vmor %vm207, %vm208
    %v210 = vsel %vm209, %v202, %v206
    %v211 = vand.u32 2147483647, %v138
    %vm212 = vcmp.eq.f32.partialorder %v211, 8.507059e+37
    %v213 = vand.u32 %v138, 2147483648
    %v214 = vor.u32 1.1754944e-38, %v213
    %v215 = vsel %vm212, %v214, %v210
    %v216 = vmul.f32 1.0, %v215
    %v217 = vrcp.pop %v139
    %v218 = vmul.f32 %v139, %v217
    %v219 = vsub.f32 1.0, %v218
    %v220 = vmul.f32 %v217, %v219
    %v221 = vadd.f32 %v217, %v220
    %vm222 = vweird.f32 %v139
    %vm223 = vweird.f32 %v217
    %vm224 = vmor %vm222, %vm223
    %v225 = vsel %vm224, %v217, %v221
    %v226 = vand.u32 2147483647, %v139
    %vm227 = vcmp.eq.f32.partialorder %v226, 8.507059e+37
    %v228 = vand.u32 %v139, 2147483648
    %v229 = vor.u32 1.1754944e-38, %v228
    %v230 = vsel %vm227, %v229, %v225
    %v231 = vmul.f32 1.0, %v230
    %v232 = vrcp.pop %v140
    %v233 = vmul.f32 %v140, %v232
    %v234 = vsub.f32 1.0, %v233
    %v235 = vmul.f32 %v232, %v234
    %v236 = vadd.f32 %v232, %v235
    %vm237 = vweird.f32 %v140
    %vm238 = vweird.f32 %v232
    %vm239 = vmor %vm237, %vm238
    %v240 = vsel %vm239, %v232, %v236
    %v241 = vand.u32 2147483647, %v140
    %vm242 = vcmp.eq.f32.partialorder %v241, 8.507059e+37
    %v243 = vand.u32 %v140, 2147483648
    %v244 = vor.u32 1.1754944e-38, %v243
    %v245 = vsel %vm242, %v244, %v240
    %v246 = vmul.f32 1.0, %v245
    %v247 = vrcp.pop %v141
    %v248 = vmul.f32 %v141, %v247
    %v249 = vsub.f32 1.0, %v248
    %v250 = vmul.f32 %v247, %v249
    %v251 = vadd.f32 %v247, %v250
    %vm252 = vweird.f32 %v141
    %vm253 = vweird.f32 %v247
    %vm254 = vmor %vm252, %vm253
    %v255 = vsel %vm254, %v247, %v251
    %v256 = vand.u32 2147483647, %v141
    %vm257 = vcmp.eq.f32.partialorder %v256, 8.507059e+37
    %v258 = vand.u32 %v141, 2147483648
    %v259 = vor.u32 1.1754944e-38, %v258
    %v260 = vsel %vm257, %v259, %v255
    %v261 = vmul.f32 1.0, %v260
    %v262 = vmul.f32 %v37, %v156
    %v263 = vmul.f32 %v38, %v171
    %v264 = vmul.f32 %v39, %v186
    %v265 = vmul.f32 %v40, %v201
    %v266 = vmul.f32 %v41, %v216
    %v267 = vmul.f32 %v42, %v231
    %v268 = vmul.f32 %v43, %v246
    %v269 = vmul.f32 %v44, %v261
    %v270 = vstv %s36
    %v271 = vmul.f32 %v270, %v37
    %v272 = vmul.f32 %v270, %v38
    %v273 = vmul.f32 %v270, %v39
    %v274 = vmul.f32 %v270, %v40
    %v275 = vmul.f32 %v270, %v41
    %v276 = vmul.f32 %v270, %v42
    %v277 = vmul.f32 %v270, %v43
    %v278 = vmul.f32 %v270, %v44
    %v279 = vand.u32 2147483647, %v271
    %vm280 = vcmp.le.f32.partialorder %v279, 0.7853982
    %vm281 = vcmp.lt.s32.totalorder %v271, 0
    %v282 = vand.u32 %v271, 2139095040
    %v283 = vshrl.u32 %v282, 23
    %v284 = vsub.s32 %v283, 127
    %v285 = vand.u32 2147483647, %v271
    %v286 = vand.u32 %v285, 8388607
    %v287 = vor.u32 %v286, 8388608
    %v288 = vsub.s32 0, %v287
    %v289 = vadd.s32 %v284, 1
    %vm290 = vcmp.gt.s32.totalorder %v289, 0
    %v291 = vsel %vm290, %v289, 0
    %v292 = vshrl.u32 %v291, 5
    %v293 = vand.u32 %v291, 31
    %v294 = vsub.s32 32, %v293
    %v295 = vshrl.u32 683565275, %v294
    %v296 = vshll.u32 683565275, %v293
    %v297 = vshrl.u32 2475754826, %v294
    %v298 = vor.u32 %v296, %v297
    %v299 = vshll.u32 2475754826, %v293
    %v300 = vshrl.u32 2131351028, %v294
    %v301 = vor.u32 %v299, %v300
    %v302 = vshll.u32 2131351028, %v293
    %v303 = vshrl.u32 2102212464, %v294
    %v304 = vor.u32 %v302, %v303
    %v305 = vshll.u32 2102212464, %v293
    %v306 = vshrl.u32 920167782, %v294
    %v307 = vor.u32 %v305, %v306
    %v308 = vshll.u32 920167782, %v293
    %v309 = vshrl.u32 1326507024, %v294
    %v310 = vor.u32 %v308, %v309
    %vm311 = vcmp.lt.s32.totalorder %v292, 1
    %vm312 = vcmp.lt.s32.totalorder %v292, 2
    %vm313 = vcmp.lt.s32.totalorder %v292, 3
    %vm314 = vcmp.lt.s32.totalorder %v292, 4
    %v315 = vsel %vm311, %v295, %v298
    %v316 = vsel %vm314, %v304, 2102212464
    %v317 = vsel %vm313, %v301, %v316
    %v318 = vsel %vm312, %v315, %v317
    %v319 = vsel %vm311, %v298, %v301
    %v320 = vsel %vm314, %v307, 920167782
    %v321 = vsel %vm313, %v304, %v320
    %v322 = vsel %vm312, %v319, %v321
    %v323 = vsel %vm311, %v301, %v304
    %v324 = vsel %vm314, %v310, 1326507024
    %v325 = vsel %vm313, %v307, %v324
    %v326 = vsel %vm312, %v323, %v325
    %v327 = vshll.u32 %v287, 8
    %v328 = vand.u32 %v327, 65535
    %v329 = vshrl.u32 %v327, 16
    %v330 = vand.u32 %v326, 65535
    %v331 = vshrl.u32 %v326, 16
    %v332 = vmul.u32 %v328, %v330
    %v333 = vmul.u32 %v328, %v331
    %v334 = vmul.u32 %v329, %v330
    %v335 = vmul.u32 %v329, %v331
    %v336 = vshll.u32 %v333, 16
    %v337 = vshrl.u32 %v333, 16
    %v338 = vshll.u32 %v334, 16
    %v339 = vshrl.u32 %v334, 16
    %vm340 = vc.u32 %v332, %v336
    %v341 = vsel %vm340, 1, 0
    %v342 = vadd.s32 %v332, %v336
    %v343 = vadd.s32 %v335, %v341
    %vm344 = vc.u32 %v342, %v338
    %v345 = vsel %vm344, 1, 0
    %v346 = vadd.s32 %v342, %v338
    %v347 = vadd.s32 %v343, %v345
    %v348 = vadd.s32 %v347, %v337
    %v349 = vadd.s32 %v348, %v339
    %v350 = vand.u32 %v327, 65535
    %v351 = vshrl.u32 %v327, 16
    %v352 = vand.u32 %v322, 65535
    %v353 = vshrl.u32 %v322, 16
    %v354 = vmul.u32 %v350, %v352
    %v355 = vmul.u32 %v350, %v353
    %v356 = vmul.u32 %v351, %v352
    %v357 = vmul.u32 %v351, %v353
    %v358 = vshll.u32 %v355, 16
    %v359 = vshrl.u32 %v355, 16
    %v360 = vshll.u32 %v356, 16
    %v361 = vshrl.u32 %v356, 16
    %vm362 = vc.u32 %v354, %v358
    %v363 = vsel %vm362, 1, 0
    %v364 = vadd.s32 %v354, %v358
    %v365 = vadd.s32 %v357, %v363
    %vm366 = vc.u32 %v364, %v360
    %v367 = vsel %vm366, 1, 0
    %v368 = vadd.s32 %v364, %v360
    %v369 = vadd.s32 %v365, %v367
    %v370 = vadd.s32 %v369, %v359
    %v371 = vadd.s32 %v370, %v361
    %v372 = vmul.u32 %v327, %v318
    %v373 = vadd.s32 %v349, %v368
    %vm374 = vc.u32 %v349, %v368
    %v375 = vadd.s32 %v371, 1
    %v376 = vsel %vm374, %v375, %v371
    %v377 = vadd.s32 %v372, %v376
    %v378 = vadd.s32 %v377, 536870912
    %v379 = vshrl.u32 %v378, 30
    %v380 = vshll.u32 %v379, 30
    %v381 = vsub.s32 %v377, %v380
    %vm382 = vcmp.lt.s32.totalorder %v381, 0
    %v383 = vsub.s32 0, %v381
    %v384 = vsel %vm382, %v383, %v381
    %v385 = vclz %v384
    %v386 = vsub.s32 %v385, 2
    %vm387 = vcmp.gt.s32.totalorder 0, %v386
    %v388 = vsel %vm387, 0, %v386
    %v389 = vsub.s32 32, %v388
    %v390 = vshll.u32 %v381, %v388
    %v391 = vshrl.u32 %v373, %v389
    %v392 = vor.u32 %v390, %v391
    %v393 = vsub.s32 4294967266, %v388
    %v394 = vadd.s32 %v393, 127
    %v395 = vshll.u32 %v394, 23
    %v396 = vor.u32 4788187, %v395
    %v397 = vand.u32 2147483647, %v396
    %v399 = vcvt.s32.f32 %v392
    %v400 = vmul.f32 %v399, %v397
    %v401 = vxor.u32 %v400, 2147483648
    %v402 = vsel %vm281, %v401, %v400
    %v403 = vsub.s32 4, %v379
    %v404 = vsel %vm281, %v403, %v379
    %v405 = vsel %vm280, %v271, %v402
    %v406 = vsel %vm280, 0, %v404
    %v407 = vmul.f32 %v405, %v405
    %v408 = vmul.f32 %v407, -0.001358992
    %v409 = vadd.f32 %v408, 0.041655596
    %v410 = vmul.f32 %v407, %v409
    %v411 = vadd.f32 %v410, -0.4999988
    %v412 = vmul.f32 %v407, %v411
    %v413 = vadd.f32 1.0, %v412
    %v414 = vmul.f32 %v405, %v405
    %v415 = vmul.f32 %v414, -0.00019511016
    %v416 = vadd.f32 %v415, 0.008332121
    %v417 = vmul.f32 %v414, %v416
    %v418 = vadd.f32 %v417, -0.16666654
    %v419 = vmul.f32 %v414, %v418
    %v420 = vadd.f32 %v419, 1.0
    %v421 = vmul.f32 %v420, %v405
    %vm422 = vweird.f32 %v271
    %v423 = vadd.s32 %v406, 3
    %v424 = vand.u32 %v423, 3
    %vm425 = vcmp.lt.s32.totalorder %v424, 2
    %vm426 = vcmp.eq.s32.totalorder %v424, 0
    %v427 = vxor.u32 %v421, 2147483648
    %v428 = vsel %vm426, %v413, %v427
    %vm429 = vcmp.eq.s32.totalorder %v424, 2
    %v430 = vxor.u32 %v413, 2147483648
    %v431 = vsel %vm429, %v430, %v421
    %v432 = vsel %vm425, %v428, %v431
    %v433 = vsel %vm422, nan, %v432
    %v434 = vand.u32 2147483647, %v272
    %vm435 = vcmp.le.f32.partialorder %v434, 0.7853982
    %vm436 = vcmp.lt.s32.totalorder %v272, 0
    %v437 = vand.u32 %v272, 2139095040
    %v438 = vshrl.u32 %v437, 23
    %v439 = vsub.s32 %v438, 127
    %v440 = vand.u32 2147483647, %v272
    %v441 = vand.u32 %v440, 8388607
    %v442 = vor.u32 %v441, 8388608
    %v443 = vsub.s32 0, %v442
    %v444 = vadd.s32 %v439, 1
    %vm445 = vcmp.gt.s32.totalorder %v444, 0
    %v446 = vsel %vm445, %v444, 0
    %v447 = vshrl.u32 %v446, 5
    %v448 = vand.u32 %v446, 31
    %v449 = vsub.s32 32, %v448
    %v450 = vshrl.u32 683565275, %v449
    %v451 = vshll.u32 683565275, %v448
    %v452 = vshrl.u32 2475754826, %v449
    %v453 = vor.u32 %v451, %v452
    %v454 = vshll.u32 2475754826, %v448
    %v455 = vshrl.u32 2131351028, %v449
    %v456 = vor.u32 %v454, %v455
    %v457 = vshll.u32 2131351028, %v448
    %v458 = vshrl.u32 2102212464, %v449
    %v459 = vor.u32 %v457, %v458
    %v460 = vshll.u32 2102212464, %v448
    %v461 = vshrl.u32 920167782, %v449
    %v462 = vor.u32 %v460, %v461
    %v463 = vshll.u32 920167782, %v448
    %v464 = vshrl.u32 1326507024, %v449
    %v465 = vor.u32 %v463, %v464
    %vm466 = vcmp.lt.s32.totalorder %v447, 1
    %vm467 = vcmp.lt.s32.totalorder %v447, 2
    %vm468 = vcmp.lt.s32.totalorder %v447, 3
    %vm469 = vcmp.lt.s32.totalorder %v447, 4
    %v470 = vsel %vm466, %v450, %v453
    %v471 = vsel %vm469, %v459, 2102212464
    %v472 = vsel %vm468, %v456, %v471
    %v473 = vsel %vm467, %v470, %v472
    %v474 = vsel %vm466, %v453, %v456
    %v475 = vsel %vm469, %v462, 920167782
    %v476 = vsel %vm468, %v459, %v475
    %v477 = vsel %vm467, %v474, %v476
    %v478 = vsel %vm466, %v456, %v459
    %v479 = vsel %vm469, %v465, 1326507024
    %v480 = vsel %vm468, %v462, %v479
    %v481 = vsel %vm467, %v478, %v480
    %v482 = vshll.u32 %v442, 8
    %v483 = vand.u32 %v482, 65535
    %v484 = vshrl.u32 %v482, 16
    %v485 = vand.u32 %v481, 65535
    %v486 = vshrl.u32 %v481, 16
    %v487 = vmul.u32 %v483, %v485
    %v488 = vmul.u32 %v483, %v486
    %v489 = vmul.u32 %v484, %v485
    %v490 = vmul.u32 %v484, %v486
    %v491 = vshll.u32 %v488, 16
    %v492 = vshrl.u32 %v488, 16
    %v493 = vshll.u32 %v489, 16
    %v494 = vshrl.u32 %v489, 16
    %vm495 = vc.u32 %v487, %v491
    %v496 = vsel %vm495, 1, 0
    %v497 = vadd.s32 %v487, %v491
    %v498 = vadd.s32 %v490, %v496
    %vm499 = vc.u32 %v497, %v493
    %v500 = vsel %vm499, 1, 0
    %v501 = vadd.s32 %v497, %v493
    %v502 = vadd.s32 %v498, %v500
    %v503 = vadd.s32 %v502, %v492
    %v504 = vadd.s32 %v503, %v494
    %v505 = vand.u32 %v482, 65535
    %v506 = vshrl.u32 %v482, 16
    %v507 = vand.u32 %v477, 65535
    %v508 = vshrl.u32 %v477, 16
    %v509 = vmul.u32 %v505, %v507
    %v510 = vmul.u32 %v505, %v508
    %v511 = vmul.u32 %v506, %v507
    %v512 = vmul.u32 %v506, %v508
    %v513 = vshll.u32 %v510, 16
    %v514 = vshrl.u32 %v510, 16
    %v515 = vshll.u32 %v511, 16
    %v516 = vshrl.u32 %v511, 16
    %vm517 = vc.u32 %v509, %v513
    %v518 = vsel %vm517, 1, 0
    %v519 = vadd.s32 %v509, %v513
    %v520 = vadd.s32 %v512, %v518
    %vm521 = vc.u32 %v519, %v515
    %v522 = vsel %vm521, 1, 0
    %v523 = vadd.s32 %v519, %v515
    %v524 = vadd.s32 %v520, %v522
    %v525 = vadd.s32 %v524, %v514
    %v526 = vadd.s32 %v525, %v516
    %v527 = vmul.u32 %v482, %v473
    %v528 = vadd.s32 %v504, %v523
    %vm529 = vc.u32 %v504, %v523
    %v530 = vadd.s32 %v526, 1
    %v531 = vsel %vm529, %v530, %v526
    %v532 = vadd.s32 %v527, %v531
    %v533 = vadd.s32 %v532, 536870912
    %v534 = vshrl.u32 %v533, 30
    %v535 = vshll.u32 %v534, 30
    %v536 = vsub.s32 %v532, %v535
    %vm537 = vcmp.lt.s32.totalorder %v536, 0
    %v538 = vsub.s32 0, %v536
    %v539 = vsel %vm537, %v538, %v536
    %v540 = vclz %v539
    %v541 = vsub.s32 %v540, 2
    %vm542 = vcmp.gt.s32.totalorder 0, %v541
    %v543 = vsel %vm542, 0, %v541
    %v544 = vsub.s32 32, %v543
    %v545 = vshll.u32 %v536, %v543
    %v546 = vshrl.u32 %v528, %v544
    %v547 = vor.u32 %v545, %v546
    %v548 = vsub.s32 4294967266, %v543
    %v549 = vadd.s32 %v548, 127
    %v550 = vshll.u32 %v549, 23
    %v551 = vor.u32 4788187, %v550
    %v552 = vand.u32 2147483647, %v551
    %v554 = vcvt.s32.f32 %v547
    %v555 = vmul.f32 %v554, %v552
    %v556 = vxor.u32 %v555, 2147483648
    %v557 = vsel %vm436, %v556, %v555
    %v558 = vsub.s32 4, %v534
    %v559 = vsel %vm436, %v558, %v534
    %v560 = vsel %vm435, %v272, %v557
    %v561 = vsel %vm435, 0, %v559
    %v562 = vmul.f32 %v560, %v560
    %v563 = vmul.f32 %v562, -0.001358992
    %v564 = vadd.f32 %v563, 0.041655596
    %v565 = vmul.f32 %v562, %v564
    %v566 = vadd.f32 %v565, -0.4999988
    %v567 = vmul.f32 %v562, %v566
    %v568 = vadd.f32 1.0, %v567
    %v569 = vmul.f32 %v560, %v560
    %v570 = vmul.f32 %v569, -0.00019511016
    %v571 = vadd.f32 %v570, 0.008332121
    %v572 = vmul.f32 %v569, %v571
    %v573 = vadd.f32 %v572, -0.16666654
    %v574 = vmul.f32 %v569, %v573
    %v575 = vadd.f32 %v574, 1.0
    %v576 = vmul.f32 %v575, %v560
    %vm577 = vweird.f32 %v272
    %v578 = vadd.s32 %v561, 3
    %v579 = vand.u32 %v578, 3
    %vm580 = vcmp.lt.s32.totalorder %v579, 2
    %vm581 = vcmp.eq.s32.totalorder %v579, 0
    %v582 = vxor.u32 %v576, 2147483648
    %v583 = vsel %vm581, %v568, %v582
    %vm584 = vcmp.eq.s32.totalorder %v579, 2
    %v585 = vxor.u32 %v568, 2147483648
    %v586 = vsel %vm584, %v585, %v576
    %v587 = vsel %vm580, %v583, %v586
    %v588 = vsel %vm577, nan, %v587
    %v589 = vand.u32 2147483647, %v273
    %vm590 = vcmp.le.f32.partialorder %v589, 0.7853982
    %vm591 = vcmp.lt.s32.totalorder %v273, 0
    %v592 = vand.u32 %v273, 2139095040
    %v593 = vshrl.u32 %v592, 23
    %v594 = vsub.s32 %v593, 127
    %v595 = vand.u32 2147483647, %v273
    %v596 = vand.u32 %v595, 8388607
    %v597 = vor.u32 %v596, 8388608
    %v598 = vsub.s32 0, %v597
    %v599 = vadd.s32 %v594, 1
    %vm600 = vcmp.gt.s32.totalorder %v599, 0
    %v601 = vsel %vm600, %v599, 0
    %v602 = vshrl.u32 %v601, 5
    %v603 = vand.u32 %v601, 31
    %v604 = vsub.s32 32, %v603
    %v605 = vshrl.u32 683565275, %v604
    %v606 = vshll.u32 683565275, %v603
    %v607 = vshrl.u32 2475754826, %v604
    %v608 = vor.u32 %v606, %v607
    %v609 = vshll.u32 2475754826, %v603
    %v610 = vshrl.u32 2131351028, %v604
    %v611 = vor.u32 %v609, %v610
    %v612 = vshll.u32 2131351028, %v603
    %v613 = vshrl.u32 2102212464, %v604
    %v614 = vor.u32 %v612, %v613
    %v615 = vshll.u32 2102212464, %v603
    %v616 = vshrl.u32 920167782, %v604
    %v617 = vor.u32 %v615, %v616
    %v618 = vshll.u32 920167782, %v603
    %v619 = vshrl.u32 1326507024, %v604
    %v620 = vor.u32 %v618, %v619
    %vm621 = vcmp.lt.s32.totalorder %v602, 1
    %vm622 = vcmp.lt.s32.totalorder %v602, 2
    %vm623 = vcmp.lt.s32.totalorder %v602, 3
    %vm624 = vcmp.lt.s32.totalorder %v602, 4
    %v625 = vsel %vm621, %v605, %v608
    %v626 = vsel %vm624, %v614, 2102212464
    %v627 = vsel %vm623, %v611, %v626
    %v628 = vsel %vm622, %v625, %v627
    %v629 = vsel %vm621, %v608, %v611
    %v630 = vsel %vm624, %v617, 920167782
    %v631 = vsel %vm623, %v614, %v630
    %v632 = vsel %vm622, %v629, %v631
    %v633 = vsel %vm621, %v611, %v614
    %v634 = vsel %vm624, %v620, 1326507024
    %v635 = vsel %vm623, %v617, %v634
    %v636 = vsel %vm622, %v633, %v635
    %v637 = vshll.u32 %v597, 8
    %v638 = vand.u32 %v637, 65535
    %v639 = vshrl.u32 %v637, 16
    %v640 = vand.u32 %v636, 65535
    %v641 = vshrl.u32 %v636, 16
    %v642 = vmul.u32 %v638, %v640
    %v643 = vmul.u32 %v638, %v641
    %v644 = vmul.u32 %v639, %v640
    %v645 = vmul.u32 %v639, %v641
    %v646 = vshll.u32 %v643, 16
    %v647 = vshrl.u32 %v643, 16
    %v648 = vshll.u32 %v644, 16
    %v649 = vshrl.u32 %v644, 16
    %vm650 = vc.u32 %v642, %v646
    %v651 = vsel %vm650, 1, 0
    %v652 = vadd.s32 %v642, %v646
    %v653 = vadd.s32 %v645, %v651
    %vm654 = vc.u32 %v652, %v648
    %v655 = vsel %vm654, 1, 0
    %v656 = vadd.s32 %v652, %v648
    %v657 = vadd.s32 %v653, %v655
    %v658 = vadd.s32 %v657, %v647
    %v659 = vadd.s32 %v658, %v649
    %v660 = vand.u32 %v637, 65535
    %v661 = vshrl.u32 %v637, 16
    %v662 = vand.u32 %v632, 65535
    %v663 = vshrl.u32 %v632, 16
    %v664 = vmul.u32 %v660, %v662
    %v665 = vmul.u32 %v660, %v663
    %v666 = vmul.u32 %v661, %v662
    %v667 = vmul.u32 %v661, %v663
    %v668 = vshll.u32 %v665, 16
    %v669 = vshrl.u32 %v665, 16
    %v670 = vshll.u32 %v666, 16
    %v671 = vshrl.u32 %v666, 16
    %vm672 = vc.u32 %v664, %v668
    %v673 = vsel %vm672, 1, 0
    %v674 = vadd.s32 %v664, %v668
    %v675 = vadd.s32 %v667, %v673
    %vm676 = vc.u32 %v674, %v670
    %v677 = vsel %vm676, 1, 0
    %v678 = vadd.s32 %v674, %v670
    %v679 = vadd.s32 %v675, %v677
    %v680 = vadd.s32 %v679, %v669
    %v681 = vadd.s32 %v680, %v671
    %v682 = vmul.u32 %v637, %v628
    %v683 = vadd.s32 %v659, %v678
    %vm684 = vc.u32 %v659, %v678
    %v685 = vadd.s32 %v681, 1
    %v686 = vsel %vm684, %v685, %v681
    %v687 = vadd.s32 %v682, %v686
    %v688 = vadd.s32 %v687, 536870912
    %v689 = vshrl.u32 %v688, 30
    %v690 = vshll.u32 %v689, 30
    %v691 = vsub.s32 %v687, %v690
    %vm692 = vcmp.lt.s32.totalorder %v691, 0
    %v693 = vsub.s32 0, %v691
    %v694 = vsel %vm692, %v693, %v691
    %v695 = vclz %v694
    %v696 = vsub.s32 %v695, 2
    %vm697 = vcmp.gt.s32.totalorder 0, %v696
    %v698 = vsel %vm697, 0, %v696
    %v699 = vsub.s32 32, %v698
    %v700 = vshll.u32 %v691, %v698
    %v701 = vshrl.u32 %v683, %v699
    %v702 = vor.u32 %v700, %v701
    %v703 = vsub.s32 4294967266, %v698
    %v704 = vadd.s32 %v703, 127
    %v705 = vshll.u32 %v704, 23
    %v706 = vor.u32 4788187, %v705
    %v707 = vand.u32 2147483647, %v706
    %v709 = vcvt.s32.f32 %v702
    %v710 = vmul.f32 %v709, %v707
    %v711 = vxor.u32 %v710, 2147483648
    %v712 = vsel %vm591, %v711, %v710
    %v713 = vsub.s32 4, %v689
    %v714 = vsel %vm591, %v713, %v689
    %v715 = vsel %vm590, %v273, %v712
    %v716 = vsel %vm590, 0, %v714
    %v717 = vmul.f32 %v715, %v715
    %v718 = vmul.f32 %v717, -0.001358992
    %v719 = vadd.f32 %v718, 0.041655596
    %v720 = vmul.f32 %v717, %v719
    %v721 = vadd.f32 %v720, -0.4999988
    %v722 = vmul.f32 %v717, %v721
    %v723 = vadd.f32 1.0, %v722
    %v724 = vmul.f32 %v715, %v715
    %v725 = vmul.f32 %v724, -0.00019511016
    %v726 = vadd.f32 %v725, 0.008332121
    %v727 = vmul.f32 %v724, %v726
    %v728 = vadd.f32 %v727, -0.16666654
    %v729 = vmul.f32 %v724, %v728
    %v730 = vadd.f32 %v729, 1.0
    %v731 = vmul.f32 %v730, %v715
    %vm732 = vweird.f32 %v273
    %v733 = vadd.s32 %v716, 3
    %v734 = vand.u32 %v733, 3
    %vm735 = vcmp.lt.s32.totalorder %v734, 2
    %vm736 = vcmp.eq.s32.totalorder %v734, 0
    %v737 = vxor.u32 %v731, 2147483648
    %v738 = vsel %vm736, %v723, %v737
    %vm739 = vcmp.eq.s32.totalorder %v734, 2
    %v740 = vxor.u32 %v723, 2147483648
    %v741 = vsel %vm739, %v740, %v731
    %v742 = vsel %vm735, %v738, %v741
    %v743 = vsel %vm732, nan, %v742
    %v744 = vand.u32 2147483647, %v274
    %vm745 = vcmp.le.f32.partialorder %v744, 0.7853982
    %vm746 = vcmp.lt.s32.totalorder %v274, 0
    %v747 = vand.u32 %v274, 2139095040
    %v748 = vshrl.u32 %v747, 23
    %v749 = vsub.s32 %v748, 127
    %v750 = vand.u32 2147483647, %v274
    %v751 = vand.u32 %v750, 8388607
    %v752 = vor.u32 %v751, 8388608
    %v753 = vsub.s32 0, %v752
    %v754 = vadd.s32 %v749, 1
    %vm755 = vcmp.gt.s32.totalorder %v754, 0
    %v756 = vsel %vm755, %v754, 0
    %v757 = vshrl.u32 %v756, 5
    %v758 = vand.u32 %v756, 31
    %v759 = vsub.s32 32, %v758
    %v760 = vshrl.u32 683565275, %v759
    %v761 = vshll.u32 683565275, %v758
    %v762 = vshrl.u32 2475754826, %v759
    %v763 = vor.u32 %v761, %v762
    %v764 = vshll.u32 2475754826, %v758
    %v765 = vshrl.u32 2131351028, %v759
    %v766 = vor.u32 %v764, %v765
    %v767 = vshll.u32 2131351028, %v758
    %v768 = vshrl.u32 2102212464, %v759
    %v769 = vor.u32 %v767, %v768
    %v770 = vshll.u32 2102212464, %v758
    %v771 = vshrl.u32 920167782, %v759
    %v772 = vor.u32 %v770, %v771
    %v773 = vshll.u32 920167782, %v758
    %v774 = vshrl.u32 1326507024, %v759
    %v775 = vor.u32 %v773, %v774
    %vm776 = vcmp.lt.s32.totalorder %v757, 1
    %vm777 = vcmp.lt.s32.totalorder %v757, 2
    %vm778 = vcmp.lt.s32.totalorder %v757, 3
    %vm779 = vcmp.lt.s32.totalorder %v757, 4
    %v780 = vsel %vm776, %v760, %v763
    %v781 = vsel %vm779, %v769, 2102212464
    %v782 = vsel %vm778, %v766, %v781
    %v783 = vsel %vm777, %v780, %v782
    %v784 = vsel %vm776, %v763, %v766
    %v785 = vsel %vm779, %v772, 920167782
    %v786 = vsel %vm778, %v769, %v785
    %v787 = vsel %vm777, %v784, %v786
    %v788 = vsel %vm776, %v766, %v769
    %v789 = vsel %vm779, %v775, 1326507024
    %v790 = vsel %vm778, %v772, %v789
    %v791 = vsel %vm777, %v788, %v790
    %v792 = vshll.u32 %v752, 8
    %v793 = vand.u32 %v792, 65535
    %v794 = vshrl.u32 %v792, 16
    %v795 = vand.u32 %v791, 65535
    %v796 = vshrl.u32 %v791, 16
    %v797 = vmul.u32 %v793, %v795
    %v798 = vmul.u32 %v793, %v796
    %v799 = vmul.u32 %v794, %v795
    %v800 = vmul.u32 %v794, %v796
    %v801 = vshll.u32 %v798, 16
    %v802 = vshrl.u32 %v798, 16
    %v803 = vshll.u32 %v799, 16
    %v804 = vshrl.u32 %v799, 16
    %vm805 = vc.u32 %v797, %v801
    %v806 = vsel %vm805, 1, 0
    %v807 = vadd.s32 %v797, %v801
    %v808 = vadd.s32 %v800, %v806
    %vm809 = vc.u32 %v807, %v803
    %v810 = vsel %vm809, 1, 0
    %v811 = vadd.s32 %v807, %v803
    %v812 = vadd.s32 %v808, %v810
    %v813 = vadd.s32 %v812, %v802
    %v814 = vadd.s32 %v813, %v804
    %v815 = vand.u32 %v792, 65535
    %v816 = vshrl.u32 %v792, 16
    %v817 = vand.u32 %v787, 65535
    %v818 = vshrl.u32 %v787, 16
    %v819 = vmul.u32 %v815, %v817
    %v820 = vmul.u32 %v815, %v818
    %v821 = vmul.u32 %v816, %v817
    %v822 = vmul.u32 %v816, %v818
    %v823 = vshll.u32 %v820, 16
    %v824 = vshrl.u32 %v820, 16
    %v825 = vshll.u32 %v821, 16
    %v826 = vshrl.u32 %v821, 16
    %vm827 = vc.u32 %v819, %v823
    %v828 = vsel %vm827, 1, 0
    %v829 = vadd.s32 %v819, %v823
    %v830 = vadd.s32 %v822, %v828
    %vm831 = vc.u32 %v829, %v825
    %v832 = vsel %vm831, 1, 0
    %v833 = vadd.s32 %v829, %v825
    %v834 = vadd.s32 %v830, %v832
    %v835 = vadd.s32 %v834, %v824
    %v836 = vadd.s32 %v835, %v826
    %v837 = vmul.u32 %v792, %v783
    %v838 = vadd.s32 %v814, %v833
    %vm839 = vc.u32 %v814, %v833
    %v840 = vadd.s32 %v836, 1
    %v841 = vsel %vm839, %v840, %v836
    %v842 = vadd.s32 %v837, %v841
    %v843 = vadd.s32 %v842, 536870912
    %v844 = vshrl.u32 %v843, 30
    %v845 = vshll.u32 %v844, 30
    %v846 = vsub.s32 %v842, %v845
    %vm847 = vcmp.lt.s32.totalorder %v846, 0
    %v848 = vsub.s32 0, %v846
    %v849 = vsel %vm847, %v848, %v846
    %v850 = vclz %v849
    %v851 = vsub.s32 %v850, 2
    %vm852 = vcmp.gt.s32.totalorder 0, %v851
    %v853 = vsel %vm852, 0, %v851
    %v854 = vsub.s32 32, %v853
    %v855 = vshll.u32 %v846, %v853
    %v856 = vshrl.u32 %v838, %v854
    %v857 = vor.u32 %v855, %v856
    %v858 = vsub.s32 4294967266, %v853
    %v859 = vadd.s32 %v858, 127
    %v860 = vshll.u32 %v859, 23
    %v861 = vor.u32 4788187, %v860
    %v862 = vand.u32 2147483647, %v861
    %v864 = vcvt.s32.f32 %v857
    %v865 = vmul.f32 %v864, %v862
    %v866 = vxor.u32 %v865, 2147483648
    %v867 = vsel %vm746, %v866, %v865
    %v868 = vsub.s32 4, %v844
    %v869 = vsel %vm746, %v868, %v844
    %v870 = vsel %vm745, %v274, %v867
    %v871 = vsel %vm745, 0, %v869
    %v872 = vmul.f32 %v870, %v870
    %v873 = vmul.f32 %v872, -0.001358992
    %v874 = vadd.f32 %v873, 0.041655596
    %v875 = vmul.f32 %v872, %v874
    %v876 = vadd.f32 %v875, -0.4999988
    %v877 = vmul.f32 %v872, %v876
    %v878 = vadd.f32 1.0, %v877
    %v879 = vmul.f32 %v870, %v870
    %v880 = vmul.f32 %v879, -0.00019511016
    %v881 = vadd.f32 %v880, 0.008332121
    %v882 = vmul.f32 %v879, %v881
    %v883 = vadd.f32 %v882, -0.16666654
    %v884 = vmul.f32 %v879, %v883
    %v885 = vadd.f32 %v884, 1.0
    %v886 = vmul.f32 %v885, %v870
    %vm887 = vweird.f32 %v274
    %v888 = vadd.s32 %v871, 3
    %v889 = vand.u32 %v888, 3
    %vm890 = vcmp.lt.s32.totalorder %v889, 2
    %vm891 = vcmp.eq.s32.totalorder %v889, 0
    %v892 = vxor.u32 %v886, 2147483648
    %v893 = vsel %vm891, %v878, %v892
    %vm894 = vcmp.eq.s32.totalorder %v889, 2
    %v895 = vxor.u32 %v878, 2147483648
    %v896 = vsel %vm894, %v895, %v886
    %v897 = vsel %vm890, %v893, %v896
    %v898 = vsel %vm887, nan, %v897
    %v899 = vand.u32 2147483647, %v275
    %vm900 = vcmp.le.f32.partialorder %v899, 0.7853982
    %vm901 = vcmp.lt.s32.totalorder %v275, 0
    %v902 = vand.u32 %v275, 2139095040
    %v903 = vshrl.u32 %v902, 23
    %v904 = vsub.s32 %v903, 127
    %v905 = vand.u32 2147483647, %v275
    %v906 = vand.u32 %v905, 8388607
    %v907 = vor.u32 %v906, 8388608
    %v908 = vsub.s32 0, %v907
    %v909 = vadd.s32 %v904, 1
    %vm910 = vcmp.gt.s32.totalorder %v909, 0
    %v911 = vsel %vm910, %v909, 0
    %v912 = vshrl.u32 %v911, 5
    %v913 = vand.u32 %v911, 31
    %v914 = vsub.s32 32, %v913
    %v915 = vshrl.u32 683565275, %v914
    %v916 = vshll.u32 683565275, %v913
    %v917 = vshrl.u32 2475754826, %v914
    %v918 = vor.u32 %v916, %v917
    %v919 = vshll.u32 2475754826, %v913
    %v920 = vshrl.u32 2131351028, %v914
    %v921 = vor.u32 %v919, %v920
    %v922 = vshll.u32 2131351028, %v913
    %v923 = vshrl.u32 2102212464, %v914
    %v924 = vor.u32 %v922, %v923
    %v925 = vshll.u32 2102212464, %v913
    %v926 = vshrl.u32 920167782, %v914
    %v927 = vor.u32 %v925, %v926
    %v928 = vshll.u32 920167782, %v913
    %v929 = vshrl.u32 1326507024, %v914
    %v930 = vor.u32 %v928, %v929
    %vm931 = vcmp.lt.s32.totalorder %v912, 1
    %vm932 = vcmp.lt.s32.totalorder %v912, 2
    %vm933 = vcmp.lt.s32.totalorder %v912, 3
    %vm934 = vcmp.lt.s32.totalorder %v912, 4
    %v935 = vsel %vm931, %v915, %v918
    %v936 = vsel %vm934, %v924, 2102212464
    %v937 = vsel %vm933, %v921, %v936
    %v938 = vsel %vm932, %v935, %v937
    %v939 = vsel %vm931, %v918, %v921
    %v940 = vsel %vm934, %v927, 920167782
    %v941 = vsel %vm933, %v924, %v940
    %v942 = vsel %vm932, %v939, %v941
    %v943 = vsel %vm931, %v921, %v924
    %v944 = vsel %vm934, %v930, 1326507024
    %v945 = vsel %vm933, %v927, %v944
    %v946 = vsel %vm932, %v943, %v945
    %v947 = vshll.u32 %v907, 8
    %v948 = vand.u32 %v947, 65535
    %v949 = vshrl.u32 %v947, 16
    %v950 = vand.u32 %v946, 65535
    %v951 = vshrl.u32 %v946, 16
    %v952 = vmul.u32 %v948, %v950
    %v953 = vmul.u32 %v948, %v951
    %v954 = vmul.u32 %v949, %v950
    %v955 = vmul.u32 %v949, %v951
    %v956 = vshll.u32 %v953, 16
    %v957 = vshrl.u32 %v953, 16
    %v958 = vshll.u32 %v954, 16
    %v959 = vshrl.u32 %v954, 16
    %vm960 = vc.u32 %v952, %v956
    %v961 = vsel %vm960, 1, 0
    %v962 = vadd.s32 %v952, %v956
    %v963 = vadd.s32 %v955, %v961
    %vm964 = vc.u32 %v962, %v958
    %v965 = vsel %vm964, 1, 0
    %v966 = vadd.s32 %v962, %v958
    %v967 = vadd.s32 %v963, %v965
    %v968 = vadd.s32 %v967, %v957
    %v969 = vadd.s32 %v968, %v959
    %v970 = vand.u32 %v947, 65535
    %v971 = vshrl.u32 %v947, 16
    %v972 = vand.u32 %v942, 65535
    %v973 = vshrl.u32 %v942, 16
    %v974 = vmul.u32 %v970, %v972
    %v975 = vmul.u32 %v970, %v973
    %v976 = vmul.u32 %v971, %v972
    %v977 = vmul.u32 %v971, %v973
    %v978 = vshll.u32 %v975, 16
    %v979 = vshrl.u32 %v975, 16
    %v980 = vshll.u32 %v976, 16
    %v981 = vshrl.u32 %v976, 16
    %vm982 = vc.u32 %v974, %v978
    %v983 = vsel %vm982, 1, 0
    %v984 = vadd.s32 %v974, %v978
    %v985 = vadd.s32 %v977, %v983
    %vm986 = vc.u32 %v984, %v980
    %v987 = vsel %vm986, 1, 0
    %v988 = vadd.s32 %v984, %v980
    %v989 = vadd.s32 %v985, %v987
    %v990 = vadd.s32 %v989, %v979
    %v991 = vadd.s32 %v990, %v981
    %v992 = vmul.u32 %v947, %v938
    %v993 = vadd.s32 %v969, %v988
    %vm994 = vc.u32 %v969, %v988
    %v995 = vadd.s32 %v991, 1
    %v996 = vsel %vm994, %v995, %v991
    %v997 = vadd.s32 %v992, %v996
    %v998 = vadd.s32 %v997, 536870912
    %v999 = vshrl.u32 %v998, 30
    %v1000 = vshll.u32 %v999, 30
    %v1001 = vsub.s32 %v997, %v1000
    %vm1002 = vcmp.lt.s32.totalorder %v1001, 0
    %v1003 = vsub.s32 0, %v1001
    %v1004 = vsel %vm1002, %v1003, %v1001
    %v1005 = vclz %v1004
    %v1006 = vsub.s32 %v1005, 2
    %vm1007 = vcmp.gt.s32.totalorder 0, %v1006
    %v1008 = vsel %vm1007, 0, %v1006
    %v1009 = vsub.s32 32, %v1008
    %v1010 = vshll.u32 %v1001, %v1008
    %v1011 = vshrl.u32 %v993, %v1009
    %v1012 = vor.u32 %v1010, %v1011
    %v1013 = vsub.s32 4294967266, %v1008
    %v1014 = vadd.s32 %v1013, 127
    %v1015 = vshll.u32 %v1014, 23
    %v1016 = vor.u32 4788187, %v1015
    %v1017 = vand.u32 2147483647, %v1016
    %v1019 = vcvt.s32.f32 %v1012
    %v1020 = vmul.f32 %v1019, %v1017
    %v1021 = vxor.u32 %v1020, 2147483648
    %v1022 = vsel %vm901, %v1021, %v1020
    %v1023 = vsub.s32 4, %v999
    %v1024 = vsel %vm901, %v1023, %v999
    %v1025 = vsel %vm900, %v275, %v1022
    %v1026 = vsel %vm900, 0, %v1024
    %v1027 = vmul.f32 %v1025, %v1025
    %v1028 = vmul.f32 %v1027, -0.001358992
    %v1029 = vadd.f32 %v1028, 0.041655596
    %v1030 = vmul.f32 %v1027, %v1029
    %v1031 = vadd.f32 %v1030, -0.4999988
    %v1032 = vmul.f32 %v1027, %v1031
    %v1033 = vadd.f32 1.0, %v1032
    %v1034 = vmul.f32 %v1025, %v1025
    %v1035 = vmul.f32 %v1034, -0.00019511016
    %v1036 = vadd.f32 %v1035, 0.008332121
    %v1037 = vmul.f32 %v1034, %v1036
    %v1038 = vadd.f32 %v1037, -0.16666654
    %v1039 = vmul.f32 %v1034, %v1038
    %v1040 = vadd.f32 %v1039, 1.0
    %v1041 = vmul.f32 %v1040, %v1025
    %vm1042 = vweird.f32 %v275
    %v1043 = vadd.s32 %v1026, 3
    %v1044 = vand.u32 %v1043, 3
    %vm1045 = vcmp.lt.s32.totalorder %v1044, 2
    %vm1046 = vcmp.eq.s32.totalorder %v1044, 0
    %v1047 = vxor.u32 %v1041, 2147483648
    %v1048 = vsel %vm1046, %v1033, %v1047
    %vm1049 = vcmp.eq.s32.totalorder %v1044, 2
    %v1050 = vxor.u32 %v1033, 2147483648
    %v1051 = vsel %vm1049, %v1050, %v1041
    %v1052 = vsel %vm1045, %v1048, %v1051
    %v1053 = vsel %vm1042, nan, %v1052
    %v1054 = vand.u32 2147483647, %v276
    %vm1055 = vcmp.le.f32.partialorder %v1054, 0.7853982
    %vm1056 = vcmp.lt.s32.totalorder %v276, 0
    %v1057 = vand.u32 %v276, 2139095040
    %v1058 = vshrl.u32 %v1057, 23
    %v1059 = vsub.s32 %v1058, 127
    %v1060 = vand.u32 2147483647, %v276
    %v1061 = vand.u32 %v1060, 8388607
    %v1062 = vor.u32 %v1061, 8388608
    %v1063 = vsub.s32 0, %v1062
    %v1064 = vadd.s32 %v1059, 1
    %vm1065 = vcmp.gt.s32.totalorder %v1064, 0
    %v1066 = vsel %vm1065, %v1064, 0
    %v1067 = vshrl.u32 %v1066, 5
    %v1068 = vand.u32 %v1066, 31
    %v1069 = vsub.s32 32, %v1068
    %v1070 = vshrl.u32 683565275, %v1069
    %v1071 = vshll.u32 683565275, %v1068
    %v1072 = vshrl.u32 2475754826, %v1069
    %v1073 = vor.u32 %v1071, %v1072
    %v1074 = vshll.u32 2475754826, %v1068
    %v1075 = vshrl.u32 2131351028, %v1069
    %v1076 = vor.u32 %v1074, %v1075
    %v1077 = vshll.u32 2131351028, %v1068
    %v1078 = vshrl.u32 2102212464, %v1069
    %v1079 = vor.u32 %v1077, %v1078
    %v1080 = vshll.u32 2102212464, %v1068
    %v1081 = vshrl.u32 920167782, %v1069
    %v1082 = vor.u32 %v1080, %v1081
    %v1083 = vshll.u32 920167782, %v1068
    %v1084 = vshrl.u32 1326507024, %v1069
    %v1085 = vor.u32 %v1083, %v1084
    %vm1086 = vcmp.lt.s32.totalorder %v1067, 1
    %vm1087 = vcmp.lt.s32.totalorder %v1067, 2
    %vm1088 = vcmp.lt.s32.totalorder %v1067, 3
    %vm1089 = vcmp.lt.s32.totalorder %v1067, 4
    %v1090 = vsel %vm1086, %v1070, %v1073
    %v1091 = vsel %vm1089, %v1079, 2102212464
    %v1092 = vsel %vm1088, %v1076, %v1091
    %v1093 = vsel %vm1087, %v1090, %v1092
    %v1094 = vsel %vm1086, %v1073, %v1076
    %v1095 = vsel %vm1089, %v1082, 920167782
    %v1096 = vsel %vm1088, %v1079, %v1095
    %v1097 = vsel %vm1087, %v1094, %v1096
    %v1098 = vsel %vm1086, %v1076, %v1079
    %v1099 = vsel %vm1089, %v1085, 1326507024
    %v1100 = vsel %vm1088, %v1082, %v1099
    %v1101 = vsel %vm1087, %v1098, %v1100
    %v1102 = vshll.u32 %v1062, 8
    %v1103 = vand.u32 %v1102, 65535
    %v1104 = vshrl.u32 %v1102, 16
    %v1105 = vand.u32 %v1101, 65535
    %v1106 = vshrl.u32 %v1101, 16
    %v1107 = vmul.u32 %v1103, %v1105
    %v1108 = vmul.u32 %v1103, %v1106
    %v1109 = vmul.u32 %v1104, %v1105
    %v1110 = vmul.u32 %v1104, %v1106
    %v1111 = vshll.u32 %v1108, 16
    %v1112 = vshrl.u32 %v1108, 16
    %v1113 = vshll.u32 %v1109, 16
    %v1114 = vshrl.u32 %v1109, 16
    %vm1115 = vc.u32 %v1107, %v1111
    %v1116 = vsel %vm1115, 1, 0
    %v1117 = vadd.s32 %v1107, %v1111
    %v1118 = vadd.s32 %v1110, %v1116
    %vm1119 = vc.u32 %v1117, %v1113
    %v1120 = vsel %vm1119, 1, 0
    %v1121 = vadd.s32 %v1117, %v1113
    %v1122 = vadd.s32 %v1118, %v1120
    %v1123 = vadd.s32 %v1122, %v1112
    %v1124 = vadd.s32 %v1123, %v1114
    %v1125 = vand.u32 %v1102, 65535
    %v1126 = vshrl.u32 %v1102, 16
    %v1127 = vand.u32 %v1097, 65535
    %v1128 = vshrl.u32 %v1097, 16
    %v1129 = vmul.u32 %v1125, %v1127
    %v1130 = vmul.u32 %v1125, %v1128
    %v1131 = vmul.u32 %v1126, %v1127
    %v1132 = vmul.u32 %v1126, %v1128
    %v1133 = vshll.u32 %v1130, 16
    %v1134 = vshrl.u32 %v1130, 16
    %v1135 = vshll.u32 %v1131, 16
    %v1136 = vshrl.u32 %v1131, 16
    %vm1137 = vc.u32 %v1129, %v1133
    %v1138 = vsel %vm1137, 1, 0
    %v1139 = vadd.s32 %v1129, %v1133
    %v1140 = vadd.s32 %v1132, %v1138
    %vm1141 = vc.u32 %v1139, %v1135
    %v1142 = vsel %vm1141, 1, 0
    %v1143 = vadd.s32 %v1139, %v1135
    %v1144 = vadd.s32 %v1140, %v1142
    %v1145 = vadd.s32 %v1144, %v1134
    %v1146 = vadd.s32 %v1145, %v1136
    %v1147 = vmul.u32 %v1102, %v1093
    %v1148 = vadd.s32 %v1124, %v1143
    %vm1149 = vc.u32 %v1124, %v1143
    %v1150 = vadd.s32 %v1146, 1
    %v1151 = vsel %vm1149, %v1150, %v1146
    %v1152 = vadd.s32 %v1147, %v1151
    %v1153 = vadd.s32 %v1152, 536870912
    %v1154 = vshrl.u32 %v1153, 30
    %v1155 = vshll.u32 %v1154, 30
    %v1156 = vsub.s32 %v1152, %v1155
    %vm1157 = vcmp.lt.s32.totalorder %v1156, 0
    %v1158 = vsub.s32 0, %v1156
    %v1159 = vsel %vm1157, %v1158, %v1156
    %v1160 = vclz %v1159
    %v1161 = vsub.s32 %v1160, 2
    %vm1162 = vcmp.gt.s32.totalorder 0, %v1161
    %v1163 = vsel %vm1162, 0, %v1161
    %v1164 = vsub.s32 32, %v1163
    %v1165 = vshll.u32 %v1156, %v1163
    %v1166 = vshrl.u32 %v1148, %v1164
    %v1167 = vor.u32 %v1165, %v1166
    %v1168 = vsub.s32 4294967266, %v1163
    %v1169 = vadd.s32 %v1168, 127
    %v1170 = vshll.u32 %v1169, 23
    %v1171 = vor.u32 4788187, %v1170
    %v1172 = vand.u32 2147483647, %v1171
    %v1174 = vcvt.s32.f32 %v1167
    %v1175 = vmul.f32 %v1174, %v1172
    %v1176 = vxor.u32 %v1175, 2147483648
    %v1177 = vsel %vm1056, %v1176, %v1175
    %v1178 = vsub.s32 4, %v1154
    %v1179 = vsel %vm1056, %v1178, %v1154
    %v1180 = vsel %vm1055, %v276, %v1177
    %v1181 = vsel %vm1055, 0, %v1179
    %v1182 = vmul.f32 %v1180, %v1180
    %v1183 = vmul.f32 %v1182, -0.001358992
    %v1184 = vadd.f32 %v1183, 0.041655596
    %v1185 = vmul.f32 %v1182, %v1184
    %v1186 = vadd.f32 %v1185, -0.4999988
    %v1187 = vmul.f32 %v1182, %v1186
    %v1188 = vadd.f32 1.0, %v1187
    %v1189 = vmul.f32 %v1180, %v1180
    %v1190 = vmul.f32 %v1189, -0.00019511016
    %v1191 = vadd.f32 %v1190, 0.008332121
    %v1192 = vmul.f32 %v1189, %v1191
    %v1193 = vadd.f32 %v1192, -0.16666654
    %v1194 = vmul.f32 %v1189, %v1193
    %v1195 = vadd.f32 %v1194, 1.0
    %v1196 = vmul.f32 %v1195, %v1180
    %vm1197 = vweird.f32 %v276
    %v1198 = vadd.s32 %v1181, 3
    %v1199 = vand.u32 %v1198, 3
    %vm1200 = vcmp.lt.s32.totalorder %v1199, 2
    %vm1201 = vcmp.eq.s32.totalorder %v1199, 0
    %v1202 = vxor.u32 %v1196, 2147483648
    %v1203 = vsel %vm1201, %v1188, %v1202
    %vm1204 = vcmp.eq.s32.totalorder %v1199, 2
    %v1205 = vxor.u32 %v1188, 2147483648
    %v1206 = vsel %vm1204, %v1205, %v1196
    %v1207 = vsel %vm1200, %v1203, %v1206
    %v1208 = vsel %vm1197, nan, %v1207
    %v1209 = vand.u32 2147483647, %v277
    %vm1210 = vcmp.le.f32.partialorder %v1209, 0.7853982
    %vm1211 = vcmp.lt.s32.totalorder %v277, 0
    %v1212 = vand.u32 %v277, 2139095040
    %v1213 = vshrl.u32 %v1212, 23
    %v1214 = vsub.s32 %v1213, 127
    %v1215 = vand.u32 2147483647, %v277
    %v1216 = vand.u32 %v1215, 8388607
    %v1217 = vor.u32 %v1216, 8388608
    %v1218 = vsub.s32 0, %v1217
    %v1219 = vadd.s32 %v1214, 1
    %vm1220 = vcmp.gt.s32.totalorder %v1219, 0
    %v1221 = vsel %vm1220, %v1219, 0
    %v1222 = vshrl.u32 %v1221, 5
    %v1223 = vand.u32 %v1221, 31
    %v1224 = vsub.s32 32, %v1223
    %v1225 = vshrl.u32 683565275, %v1224
    %v1226 = vshll.u32 683565275, %v1223
    %v1227 = vshrl.u32 2475754826, %v1224
    %v1228 = vor.u32 %v1226, %v1227
    %v1229 = vshll.u32 2475754826, %v1223
    %v1230 = vshrl.u32 2131351028, %v1224
    %v1231 = vor.u32 %v1229, %v1230
    %v1232 = vshll.u32 2131351028, %v1223
    %v1233 = vshrl.u32 2102212464, %v1224
    %v1234 = vor.u32 %v1232, %v1233
    %v1235 = vshll.u32 2102212464, %v1223
    %v1236 = vshrl.u32 920167782, %v1224
    %v1237 = vor.u32 %v1235, %v1236
    %v1238 = vshll.u32 920167782, %v1223
    %v1239 = vshrl.u32 1326507024, %v1224
    %v1240 = vor.u32 %v1238, %v1239
    %vm1241 = vcmp.lt.s32.totalorder %v1222, 1
    %vm1242 = vcmp.lt.s32.totalorder %v1222, 2
    %vm1243 = vcmp.lt.s32.totalorder %v1222, 3
    %vm1244 = vcmp.lt.s32.totalorder %v1222, 4
    %v1245 = vsel %vm1241, %v1225, %v1228
    %v1246 = vsel %vm1244, %v1234, 2102212464
    %v1247 = vsel %vm1243, %v1231, %v1246
    %v1248 = vsel %vm1242, %v1245, %v1247
    %v1249 = vsel %vm1241, %v1228, %v1231
    %v1250 = vsel %vm1244, %v1237, 920167782
    %v1251 = vsel %vm1243, %v1234, %v1250
    %v1252 = vsel %vm1242, %v1249, %v1251
    %v1253 = vsel %vm1241, %v1231, %v1234
    %v1254 = vsel %vm1244, %v1240, 1326507024
    %v1255 = vsel %vm1243, %v1237, %v1254
    %v1256 = vsel %vm1242, %v1253, %v1255
    %v1257 = vshll.u32 %v1217, 8
    %v1258 = vand.u32 %v1257, 65535
    %v1259 = vshrl.u32 %v1257, 16
    %v1260 = vand.u32 %v1256, 65535
    %v1261 = vshrl.u32 %v1256, 16
    %v1262 = vmul.u32 %v1258, %v1260
    %v1263 = vmul.u32 %v1258, %v1261
    %v1264 = vmul.u32 %v1259, %v1260
    %v1265 = vmul.u32 %v1259, %v1261
    %v1266 = vshll.u32 %v1263, 16
    %v1267 = vshrl.u32 %v1263, 16
    %v1268 = vshll.u32 %v1264, 16
    %v1269 = vshrl.u32 %v1264, 16
    %vm1270 = vc.u32 %v1262, %v1266
    %v1271 = vsel %vm1270, 1, 0
    %v1272 = vadd.s32 %v1262, %v1266
    %v1273 = vadd.s32 %v1265, %v1271
    %vm1274 = vc.u32 %v1272, %v1268
    %v1275 = vsel %vm1274, 1, 0
    %v1276 = vadd.s32 %v1272, %v1268
    %v1277 = vadd.s32 %v1273, %v1275
    %v1278 = vadd.s32 %v1277, %v1267
    %v1279 = vadd.s32 %v1278, %v1269
    %v1280 = vand.u32 %v1257, 65535
    %v1281 = vshrl.u32 %v1257, 16
    %v1282 = vand.u32 %v1252, 65535
    %v1283 = vshrl.u32 %v1252, 16
    %v1284 = vmul.u32 %v1280, %v1282
    %v1285 = vmul.u32 %v1280, %v1283
    %v1286 = vmul.u32 %v1281, %v1282
    %v1287 = vmul.u32 %v1281, %v1283
    %v1288 = vshll.u32 %v1285, 16
    %v1289 = vshrl.u32 %v1285, 16
    %v1290 = vshll.u32 %v1286, 16
    %v1291 = vshrl.u32 %v1286, 16
    %vm1292 = vc.u32 %v1284, %v1288
    %v1293 = vsel %vm1292, 1, 0
    %v1294 = vadd.s32 %v1284, %v1288
    %v1295 = vadd.s32 %v1287, %v1293
    %vm1296 = vc.u32 %v1294, %v1290
    %v1297 = vsel %vm1296, 1, 0
    %v1298 = vadd.s32 %v1294, %v1290
    %v1299 = vadd.s32 %v1295, %v1297
    %v1300 = vadd.s32 %v1299, %v1289
    %v1301 = vadd.s32 %v1300, %v1291
    %v1302 = vmul.u32 %v1257, %v1248
    %v1303 = vadd.s32 %v1279, %v1298
    %vm1304 = vc.u32 %v1279, %v1298
    %v1305 = vadd.s32 %v1301, 1
    %v1306 = vsel %vm1304, %v1305, %v1301
    %v1307 = vadd.s32 %v1302, %v1306
    %v1308 = vadd.s32 %v1307, 536870912
    %v1309 = vshrl.u32 %v1308, 30
    %v1310 = vshll.u32 %v1309, 30
    %v1311 = vsub.s32 %v1307, %v1310
    %vm1312 = vcmp.lt.s32.totalorder %v1311, 0
    %v1313 = vsub.s32 0, %v1311
    %v1314 = vsel %vm1312, %v1313, %v1311
    %v1315 = vclz %v1314
    %v1316 = vsub.s32 %v1315, 2
    %vm1317 = vcmp.gt.s32.totalorder 0, %v1316
    %v1318 = vsel %vm1317, 0, %v1316
    %v1319 = vsub.s32 32, %v1318
    %v1320 = vshll.u32 %v1311, %v1318
    %v1321 = vshrl.u32 %v1303, %v1319
    %v1322 = vor.u32 %v1320, %v1321
    %v1323 = vsub.s32 4294967266, %v1318
    %v1324 = vadd.s32 %v1323, 127
    %v1325 = vshll.u32 %v1324, 23
    %v1326 = vor.u32 4788187, %v1325
    %v1327 = vand.u32 2147483647, %v1326
    %v1329 = vcvt.s32.f32 %v1322
    %v1330 = vmul.f32 %v1329, %v1327
    %v1331 = vxor.u32 %v1330, 2147483648
    %v1332 = vsel %vm1211, %v1331, %v1330
    %v1333 = vsub.s32 4, %v1309
    %v1334 = vsel %vm1211, %v1333, %v1309
    %v1335 = vsel %vm1210, %v277, %v1332
    %v1336 = vsel %vm1210, 0, %v1334
    %v1337 = vmul.f32 %v1335, %v1335
    %v1338 = vmul.f32 %v1337, -0.001358992
    %v1339 = vadd.f32 %v1338, 0.041655596
    %v1340 = vmul.f32 %v1337, %v1339
    %v1341 = vadd.f32 %v1340, -0.4999988
    %v1342 = vmul.f32 %v1337, %v1341
    %v1343 = vadd.f32 1.0, %v1342
    %v1344 = vmul.f32 %v1335, %v1335
    %v1345 = vmul.f32 %v1344, -0.00019511016
    %v1346 = vadd.f32 %v1345, 0.008332121
    %v1347 = vmul.f32 %v1344, %v1346
    %v1348 = vadd.f32 %v1347, -0.16666654
    %v1349 = vmul.f32 %v1344, %v1348
    %v1350 = vadd.f32 %v1349, 1.0
    %v1351 = vmul.f32 %v1350, %v1335
    %vm1352 = vweird.f32 %v277
    %v1353 = vadd.s32 %v1336, 3
    %v1354 = vand.u32 %v1353, 3
    %vm1355 = vcmp.lt.s32.totalorder %v1354, 2
    %vm1356 = vcmp.eq.s32.totalorder %v1354, 0
    %v1357 = vxor.u32 %v1351, 2147483648
    %v1358 = vsel %vm1356, %v1343, %v1357
    %vm1359 = vcmp.eq.s32.totalorder %v1354, 2
    %v1360 = vxor.u32 %v1343, 2147483648
    %v1361 = vsel %vm1359, %v1360, %v1351
    %v1362 = vsel %vm1355, %v1358, %v1361
    %v1363 = vsel %vm1352, nan, %v1362
    %v1364 = vand.u32 2147483647, %v278
    %vm1365 = vcmp.le.f32.partialorder %v1364, 0.7853982
    %vm1366 = vcmp.lt.s32.totalorder %v278, 0
    %v1367 = vand.u32 %v278, 2139095040
    %v1368 = vshrl.u32 %v1367, 23
    %v1369 = vsub.s32 %v1368, 127
    %v1370 = vand.u32 2147483647, %v278
    %v1371 = vand.u32 %v1370, 8388607
    %v1372 = vor.u32 %v1371, 8388608
    %v1373 = vsub.s32 0, %v1372
    %v1374 = vadd.s32 %v1369, 1
    %vm1375 = vcmp.gt.s32.totalorder %v1374, 0
    %v1376 = vsel %vm1375, %v1374, 0
    %v1377 = vshrl.u32 %v1376, 5
    %v1378 = vand.u32 %v1376, 31
    %v1379 = vsub.s32 32, %v1378
    %v1380 = vshrl.u32 683565275, %v1379
    %v1381 = vshll.u32 683565275, %v1378
    %v1382 = vshrl.u32 2475754826, %v1379
    %v1383 = vor.u32 %v1381, %v1382
    %v1384 = vshll.u32 2475754826, %v1378
    %v1385 = vshrl.u32 2131351028, %v1379
    %v1386 = vor.u32 %v1384, %v1385
    %v1387 = vshll.u32 2131351028, %v1378
    %v1388 = vshrl.u32 2102212464, %v1379
    %v1389 = vor.u32 %v1387, %v1388
    %v1390 = vshll.u32 2102212464, %v1378
    %v1391 = vshrl.u32 920167782, %v1379
    %v1392 = vor.u32 %v1390, %v1391
    %v1393 = vshll.u32 920167782, %v1378
    %v1394 = vshrl.u32 1326507024, %v1379
    %v1395 = vor.u32 %v1393, %v1394
    %vm1396 = vcmp.lt.s32.totalorder %v1377, 1
    %vm1397 = vcmp.lt.s32.totalorder %v1377, 2
    %vm1398 = vcmp.lt.s32.totalorder %v1377, 3
    %vm1399 = vcmp.lt.s32.totalorder %v1377, 4
    %v1400 = vsel %vm1396, %v1380, %v1383
    %v1401 = vsel %vm1399, %v1389, 2102212464
    %v1402 = vsel %vm1398, %v1386, %v1401
    %v1403 = vsel %vm1397, %v1400, %v1402
    %v1404 = vsel %vm1396, %v1383, %v1386
    %v1405 = vsel %vm1399, %v1392, 920167782
    %v1406 = vsel %vm1398, %v1389, %v1405
    %v1407 = vsel %vm1397, %v1404, %v1406
    %v1408 = vsel %vm1396, %v1386, %v1389
    %v1409 = vsel %vm1399, %v1395, 1326507024
    %v1410 = vsel %vm1398, %v1392, %v1409
    %v1411 = vsel %vm1397, %v1408, %v1410
    %v1412 = vshll.u32 %v1372, 8
    %v1413 = vand.u32 %v1412, 65535
    %v1414 = vshrl.u32 %v1412, 16
    %v1415 = vand.u32 %v1411, 65535
    %v1416 = vshrl.u32 %v1411, 16
    %v1417 = vmul.u32 %v1413, %v1415
    %v1418 = vmul.u32 %v1413, %v1416
    %v1419 = vmul.u32 %v1414, %v1415
    %v1420 = vmul.u32 %v1414, %v1416
    %v1421 = vshll.u32 %v1418, 16
    %v1422 = vshrl.u32 %v1418, 16
    %v1423 = vshll.u32 %v1419, 16
    %v1424 = vshrl.u32 %v1419, 16
    %vm1425 = vc.u32 %v1417, %v1421
    %v1426 = vsel %vm1425, 1, 0
    %v1427 = vadd.s32 %v1417, %v1421
    %v1428 = vadd.s32 %v1420, %v1426
    %vm1429 = vc.u32 %v1427, %v1423
    %v1430 = vsel %vm1429, 1, 0
    %v1431 = vadd.s32 %v1427, %v1423
    %v1432 = vadd.s32 %v1428, %v1430
    %v1433 = vadd.s32 %v1432, %v1422
    %v1434 = vadd.s32 %v1433, %v1424
    %v1435 = vand.u32 %v1412, 65535
    %v1436 = vshrl.u32 %v1412, 16
    %v1437 = vand.u32 %v1407, 65535
    %v1438 = vshrl.u32 %v1407, 16
    %v1439 = vmul.u32 %v1435, %v1437
    %v1440 = vmul.u32 %v1435, %v1438
    %v1441 = vmul.u32 %v1436, %v1437
    %v1442 = vmul.u32 %v1436, %v1438
    %v1443 = vshll.u32 %v1440, 16
    %v1444 = vshrl.u32 %v1440, 16
    %v1445 = vshll.u32 %v1441, 16
    %v1446 = vshrl.u32 %v1441, 16
    %vm1447 = vc.u32 %v1439, %v1443
    %v1448 = vsel %vm1447, 1, 0
    %v1449 = vadd.s32 %v1439, %v1443
    %v1450 = vadd.s32 %v1442, %v1448
    %vm1451 = vc.u32 %v1449, %v1445
    %v1452 = vsel %vm1451, 1, 0
    %v1453 = vadd.s32 %v1449, %v1445
    %v1454 = vadd.s32 %v1450, %v1452
    %v1455 = vadd.s32 %v1454, %v1444
    %v1456 = vadd.s32 %v1455, %v1446
    %v1457 = vmul.u32 %v1412, %v1403
    %v1458 = vadd.s32 %v1434, %v1453
    %vm1459 = vc.u32 %v1434, %v1453
    %v1460 = vadd.s32 %v1456, 1
    %v1461 = vsel %vm1459, %v1460, %v1456
    %v1462 = vadd.s32 %v1457, %v1461
    %v1463 = vadd.s32 %v1462, 536870912
    %v1464 = vshrl.u32 %v1463, 30
    %v1465 = vshll.u32 %v1464, 30
    %v1466 = vsub.s32 %v1462, %v1465
    %vm1467 = vcmp.lt.s32.totalorder %v1466, 0
    %v1468 = vsub.s32 0, %v1466
    %v1469 = vsel %vm1467, %v1468, %v1466
    %v1470 = vclz %v1469
    %v1471 = vsub.s32 %v1470, 2
    %vm1472 = vcmp.gt.s32.totalorder 0, %v1471
    %v1473 = vsel %vm1472, 0, %v1471
    %v1474 = vsub.s32 32, %v1473
    %v1475 = vshll.u32 %v1466, %v1473
    %v1476 = vshrl.u32 %v1458, %v1474
    %v1477 = vor.u32 %v1475, %v1476
    %v1478 = vsub.s32 4294967266, %v1473
    %v1479 = vadd.s32 %v1478, 127
    %v1480 = vshll.u32 %v1479, 23
    %v1481 = vor.u32 4788187, %v1480
    %v1482 = vand.u32 2147483647, %v1481
    %v1484 = vcvt.s32.f32 %v1477
    %v1485 = vmul.f32 %v1484, %v1482
    %v1486 = vxor.u32 %v1485, 2147483648
    %v1487 = vsel %vm1366, %v1486, %v1485
    %v1488 = vsub.s32 4, %v1464
    %v1489 = vsel %vm1366, %v1488, %v1464
    %v1490 = vsel %vm1365, %v278, %v1487
    %v1491 = vsel %vm1365, 0, %v1489
    %v1492 = vmul.f32 %v1490, %v1490
    %v1493 = vmul.f32 %v1492, -0.001358992
    %v1494 = vadd.f32 %v1493, 0.041655596
    %v1495 = vmul.f32 %v1492, %v1494
    %v1496 = vadd.f32 %v1495, -0.4999988
    %v1497 = vmul.f32 %v1492, %v1496
    %v1498 = vadd.f32 1.0, %v1497
    %v1499 = vmul.f32 %v1490, %v1490
    %v1500 = vmul.f32 %v1499, -0.00019511016
    %v1501 = vadd.f32 %v1500, 0.008332121
    %v1502 = vmul.f32 %v1499, %v1501
    %v1503 = vadd.f32 %v1502, -0.16666654
    %v1504 = vmul.f32 %v1499, %v1503
    %v1505 = vadd.f32 %v1504, 1.0
    %v1506 = vmul.f32 %v1505, %v1490
    %vm1507 = vweird.f32 %v278
    %v1508 = vadd.s32 %v1491, 3
    %v1509 = vand.u32 %v1508, 3
    %vm1510 = vcmp.lt.s32.totalorder %v1509, 2
    %vm1511 = vcmp.eq.s32.totalorder %v1509, 0
    %v1512 = vxor.u32 %v1506, 2147483648
    %v1513 = vsel %vm1511, %v1498, %v1512
    %vm1514 = vcmp.eq.s32.totalorder %v1509, 2
    %v1515 = vxor.u32 %v1498, 2147483648
    %v1516 = vsel %vm1514, %v1515, %v1506
    %v1517 = vsel %vm1510, %v1513, %v1516
    %v1518 = vsel %vm1507, nan, %v1517
    %v1519 = vmul.f32 %v433, 0.05
    %v1520 = vmul.f32 %v588, 0.05
    %v1521 = vmul.f32 %v743, 0.05
    %v1522 = vmul.f32 %v898, 0.05
    %v1523 = vmul.f32 %v1053, 0.05
    %v1524 = vmul.f32 %v1208, 0.05
    %v1525 = vmul.f32 %v1363, 0.05
    %v1526 = vmul.f32 %v1518, 0.05
    %v1527 = vadd.f32 %v262, %v1519
    %v1528 = vadd.f32 %v263, %v1520
    %v1529 = vadd.f32 %v264, %v1521
    %v1530 = vadd.f32 %v265, %v1522
    %v1531 = vadd.f32 %v266, %v1523
    %v1532 = vadd.f32 %v267, %v1524
    %v1533 = vadd.f32 %v268, %v1525
    %v1534 = vadd.f32 %v269, %v1526
    %v1535 = vpack.c.bf16 %v1528, %v1527
    %v1536 = vpack.c.bf16 %v1530, %v1529
    %v1537 = vpack.c.bf16 %v1532, %v1531
    %v1538 = vpack.c.bf16 %v1534, %v1533
    %v1539 = vld [vmem:[%s3] sm:$0xff]
    %v1540 = vld [vmem:[%s3 + $0x8] sm:$0xff]
    %v1541 = vld [vmem:[%s3 + $0x10] sm:$0xff]
    %v1542 = vld [vmem:[%s3 + $0x18] sm:$0xff]
    %v1543 = vld [vmem:[%s3 + $0x20] sm:$0xff]
    %v1544 = vld [vmem:[%s3 + $0x28] sm:$0xff]
    %v1545 = vld [vmem:[%s3 + $0x30] sm:$0xff]
    %v1546 = vld [vmem:[%s3 + $0x38] sm:$0xff]
    %v1547 = vld [vmem:[%s4] sm:$0xf]
    %v1549 = vperm.slane %v1547, 0
    %v1550 = vperm.slane %v1547, 1
    %v1551 = vperm.slane %v1547, 2
    %v1552 = vperm.slane %v1547, 3
    %v1565 = vunpack.c.l.b16 %v1539
    %v1566 = vunpack.c.h.b16 %v1539
    %v1567 = vunpack.c.l.b16 %v1540
    %v1568 = vunpack.c.h.b16 %v1540
    %v1569 = vunpack.c.l.b16 %v1541
    %v1570 = vunpack.c.h.b16 %v1541
    %v1571 = vunpack.c.l.b16 %v1542
    %v1572 = vunpack.c.h.b16 %v1542
    %v1573 = vunpack.c.l.b16 %v1543
    %v1574 = vunpack.c.h.b16 %v1543
    %v1575 = vunpack.c.l.b16 %v1544
    %v1576 = vunpack.c.h.b16 %v1544
    %v1577 = vunpack.c.l.b16 %v1545
    %v1578 = vunpack.c.h.b16 %v1545
    %v1579 = vunpack.c.l.b16 %v1546
    %v1580 = vunpack.c.h.b16 %v1546
    %v1581 = vpack.c.b16 %v1569, %v1565
    %v1582 = vpack.c.b16 %v1570, %v1566
    %v1583 = vpack.c.b16 %v1571, %v1567
    %v1584 = vpack.c.b16 %v1572, %v1568
    %v1585 = vpack.c.b16 %v1577, %v1573
    %v1586 = vpack.c.b16 %v1578, %v1574
    %v1587 = vpack.c.b16 %v1579, %v1575
    %v1588 = vpack.c.b16 %v1580, %v1576
    %vm1597 = vcmask 261120
    %v1599 = vsel %vm1597, %v1535, 0
    %v1602 = vsel %vm1597, %v1536, 0
    %v1605 = vsel %vm1597, %v1537, 0
    %v1608 = vsel %vm1597, %v1538, 0
    %1610 = vmatpush.bf16.msra.mxu0 0
    %1611 = vmatpush.bf16.msra.mxu0 0
    %1612 = vmatpush.bf16.msra.mxu0 0
    %1613 = vmatpush.bf16.msra.mxu0 0
    %1614 = vmatpush.bf16.msra.mxu0 0
    %1615 = vmatpush.bf16.msra.mxu0 0
    %1616 = vmatpush.bf16.msra.mxu0 %v1585
    %1617 = vmatpush.bf16.msra.mxu0 %v1581
    %1618 = vmatmul.bf16.gmra.mxu0 %v1599
    %v1619 = vpop.f32.mrf.mxu0
    %v1620 = vadd.f32 %v1549, %v1619
    %v1621 = vpop.f32.mrf.mxu0
    %v1622 = vadd.f32 %v1549, %v1621
    %1623 = vmatmul.bf16.gmra.mxu0 %v1602
    %v1624 = vpop.f32.mrf.mxu0
    %v1625 = vadd.f32 %v1549, %v1624
    %v1626 = vpop.f32.mrf.mxu0
    %v1627 = vadd.f32 %v1549, %v1626
    %1628 = vmatmul.bf16.gmra.mxu0 %v1605
    %v1629 = vpop.f32.mrf.mxu0
    %v1630 = vadd.f32 %v1549, %v1629
    %v1631 = vpop.f32.mrf.mxu0
    %v1632 = vadd.f32 %v1549, %v1631
    %1633 = vmatmul.bf16.gmra.mxu0 %v1608
    %v1634 = vpop.f32.mrf.mxu0
    %v1635 = vadd.f32 %v1549, %v1634
    %v1636 = vpop.f32.mrf.mxu0
    %v1637 = vadd.f32 %v1549, %v1636
    %1638 = vdwg.mxu0
    %1639 = vmatpush.bf16.msra.mxu0 0
    %1640 = vmatpush.bf16.msra.mxu0 0
    %1641 = vmatpush.bf16.msra.mxu0 0
    %1642 = vmatpush.bf16.msra.mxu0 0
    %1643 = vmatpush.bf16.msra.mxu0 0
    %1644 = vmatpush.bf16.msra.mxu0 0
    %1645 = vmatpush.bf16.msra.mxu0 %v1586
    %1646 = vmatpush.bf16.msra.mxu0 %v1582
    %1647 = vmatmul.bf16.gmra.mxu0 %v1599
    %v1648 = vpop.f32.mrf.mxu0
    %v1649 = vadd.f32 %v1550, %v1648
    %v1650 = vpop.f32.mrf.mxu0
    %v1651 = vadd.f32 %v1550, %v1650
    %1652 = vmatmul.bf16.gmra.mxu0 %v1602
    %v1653 = vpop.f32.mrf.mxu0
    %v1654 = vadd.f32 %v1550, %v1653
    %v1655 = vpop.f32.mrf.mxu0
    %v1656 = vadd.f32 %v1550, %v1655
    %1657 = vmatmul.bf16.gmra.mxu0 %v1605
    %v1658 = vpop.f32.mrf.mxu0
    %v1659 = vadd.f32 %v1550, %v1658
    %v1660 = vpop.f32.mrf.mxu0
    %v1661 = vadd.f32 %v1550, %v1660
    %1662 = vmatmul.bf16.gmra.mxu0 %v1608
    %v1663 = vpop.f32.mrf.mxu0
    %v1664 = vadd.f32 %v1550, %v1663
    %v1665 = vpop.f32.mrf.mxu0
    %v1666 = vadd.f32 %v1550, %v1665
    %1667 = vdwg.mxu0
    %1668 = vmatpush.bf16.msra.mxu0 0
    %1669 = vmatpush.bf16.msra.mxu0 0
    %1670 = vmatpush.bf16.msra.mxu0 0
    %1671 = vmatpush.bf16.msra.mxu0 0
    %1672 = vmatpush.bf16.msra.mxu0 0
    %1673 = vmatpush.bf16.msra.mxu0 0
    %1674 = vmatpush.bf16.msra.mxu0 %v1587
    %1675 = vmatpush.bf16.msra.mxu0 %v1583
    %1676 = vmatmul.bf16.gmra.mxu0 %v1599
    %v1677 = vpop.f32.mrf.mxu0
    %v1678 = vadd.f32 %v1551, %v1677
    %v1679 = vpop.f32.mrf.mxu0
    %v1680 = vadd.f32 %v1551, %v1679
    %1681 = vmatmul.bf16.gmra.mxu0 %v1602
    %v1682 = vpop.f32.mrf.mxu0
    %v1683 = vadd.f32 %v1551, %v1682
    %v1684 = vpop.f32.mrf.mxu0
    %v1685 = vadd.f32 %v1551, %v1684
    %1686 = vmatmul.bf16.gmra.mxu0 %v1605
    %v1687 = vpop.f32.mrf.mxu0
    %v1688 = vadd.f32 %v1551, %v1687
    %v1689 = vpop.f32.mrf.mxu0
    %v1690 = vadd.f32 %v1551, %v1689
    %1691 = vmatmul.bf16.gmra.mxu0 %v1608
    %v1692 = vpop.f32.mrf.mxu0
    %v1693 = vadd.f32 %v1551, %v1692
    %v1694 = vpop.f32.mrf.mxu0
    %v1695 = vadd.f32 %v1551, %v1694
    %1696 = vdwg.mxu0
    %1697 = vmatpush.bf16.msra.mxu0 0
    %1698 = vmatpush.bf16.msra.mxu0 0
    %1699 = vmatpush.bf16.msra.mxu0 0
    %1700 = vmatpush.bf16.msra.mxu0 0
    %1701 = vmatpush.bf16.msra.mxu0 0
    %1702 = vmatpush.bf16.msra.mxu0 0
    %1703 = vmatpush.bf16.msra.mxu0 %v1588
    %1704 = vmatpush.bf16.msra.mxu0 %v1584
    %1705 = vmatmul.bf16.gmra.mxu0 %v1599
    %v1706 = vpop.f32.mrf.mxu0
    %v1707 = vadd.f32 %v1552, %v1706
    %v1708 = vpop.f32.mrf.mxu0
    %v1709 = vadd.f32 %v1552, %v1708
    %1710 = vmatmul.bf16.gmra.mxu0 %v1602
    %v1711 = vpop.f32.mrf.mxu0
    %v1712 = vadd.f32 %v1552, %v1711
    %v1713 = vpop.f32.mrf.mxu0
    %v1714 = vadd.f32 %v1552, %v1713
    %1715 = vmatmul.bf16.gmra.mxu0 %v1605
    %v1716 = vpop.f32.mrf.mxu0
    %v1717 = vadd.f32 %v1552, %v1716
    %v1718 = vpop.f32.mrf.mxu0
    %v1719 = vadd.f32 %v1552, %v1718
    %1720 = vmatmul.bf16.gmra.mxu0 %v1608
    %v1721 = vpop.f32.mrf.mxu0
    %v1722 = vadd.f32 %v1552, %v1721
    %v1723 = vpop.f32.mrf.mxu0
    %v1724 = vadd.f32 %v1552, %v1723
    %1725 = vdwg.mxu0
    %1726 = vst [vmem:[#allocation5] sm:$0xff] %v1620
    %1727 = vst [vmem:[#allocation5 + $0x8] sm:$0xff] %v1649
    %1728 = vst [vmem:[#allocation5 + $0x10] sm:$0xff] %v1678
    %1729 = vst [vmem:[#allocation5 + $0x18] sm:$0xff] %v1707
    %1730 = vst [vmem:[#allocation5 + $0x20] sm:$0xff] %v1622
    %1731 = vst [vmem:[#allocation5 + $0x28] sm:$0xff] %v1651
    %1732 = vst [vmem:[#allocation5 + $0x30] sm:$0xff] %v1680
    %1733 = vst [vmem:[#allocation5 + $0x38] sm:$0xff] %v1709
    %1734 = vst [vmem:[#allocation5 + $0x40] sm:$0xff] %v1625
    %1735 = vst [vmem:[#allocation5 + $0x48] sm:$0xff] %v1654
    %1736 = vst [vmem:[#allocation5 + $0x50] sm:$0xff] %v1683
    %1737 = vst [vmem:[#allocation5 + $0x58] sm:$0xff] %v1712
    %1738 = vst [vmem:[#allocation5 + $0x60] sm:$0xff] %v1627
    %1739 = vst [vmem:[#allocation5 + $0x68] sm:$0xff] %v1656
    %1740 = vst [vmem:[#allocation5 + $0x70] sm:$0xff] %v1685
    %1741 = vst [vmem:[#allocation5 + $0x78] sm:$0xff] %v1714
    %1742 = vst [vmem:[#allocation5 + $0x80] sm:$0xff] %v1630
    %1743 = vst [vmem:[#allocation5 + $0x88] sm:$0xff] %v1659
    %1744 = vst [vmem:[#allocation5 + $0x90] sm:$0xff] %v1688
    %1745 = vst [vmem:[#allocation5 + $0x98] sm:$0xff] %v1717
    %1746 = vst [vmem:[#allocation5 + $0xa0] sm:$0xff] %v1632
    %1747 = vst [vmem:[#allocation5 + $0xa8] sm:$0xff] %v1661
    %1748 = vst [vmem:[#allocation5 + $0xb0] sm:$0xff] %v1690
    %1749 = vst [vmem:[#allocation5 + $0xb8] sm:$0xff] %v1719
    %1750 = vst [vmem:[#allocation5 + $0xc0] sm:$0xff] %v1635
    %1751 = vst [vmem:[#allocation5 + $0xc8] sm:$0xff] %v1664
    %1752 = vst [vmem:[#allocation5 + $0xd0] sm:$0xff] %v1693
    %1753 = vst [vmem:[#allocation5 + $0xd8] sm:$0xff] %v1722
    %1754 = vst [vmem:[#allocation5 + $0xe0] sm:$0xff] %v1637
    %1755 = vst [vmem:[#allocation5 + $0xe8] sm:$0xff] %v1666
    %1756 = vst [vmem:[#allocation5 + $0xf0] sm:$0xff] %v1695
    %1757 = vst [vmem:[#allocation5 + $0xf8] sm:$0xff] %v1724
    // Predicated region
    $region26: #{tpu_custom_call.1} parent=1 // pred_check
      _
    $region27: #{tpu_custom_call.1} parent=1 // pred_check_branch
      %1759 = sbr.rel (0) target = $region29
    $region28: #{tpu_custom_call.1} parent=1 // pred_region
      %1761 = vsyncadd [#allocation3], 0
      %s1762 = sshll.u32 [#allocation5], 4
      %s1763 = int_to_ptr.vmem [resolvable:$true] %s1762
      %s1764 = sshll.u32 %s5, 4
      %s1765 = int_to_ptr.hbm [resolvable:$true] %s1764
      %1770 = dma.vmem_to_hbm [thread:$0]  %s1763, 4096, %s1765, [#allocation3], 512, 512, 32
    $region29: #{tpu_custom_call.1} parent=1 // pred_fallthru
      _
    // Predicated region
    $region30: #{tpu_custom_call.1} parent=1 // pred_check
      _
    $region31: #{tpu_custom_call.1} parent=1 // pred_check_branch
      %1772 = sbr.rel (0) target = $region33
    $region32: #{tpu_custom_call.1} parent=1 // pred_region
      %1774 = dma.done [#allocation3], 4096
    $region33: #{tpu_custom_call.1} parent=1 // pred_fallthru
      _
    %1775 = vsyncpa [#allocation3], 1
    %1776 = vsyncpa [#allocation4], 1

</llo_original>
